<compile_context>
chip_gen: v7x
topology: tpu7x:2x2x1
jax: 0.10.0
libtpu: 0.0.40
codegen_flags: <defaults>
</compile_context>

<pallas_src>
import functools

import jax
import jax.numpy as jnp
from jax import lax
from jax.experimental import pallas as pl
from jax.experimental.pallas import tpu as pltpu


def _attention_kernel(L, enc_ref, hid_ref, wf_ref, wv_ref, ctx_ref, alpha_ref):
    G, Lp, F = enc_ref.shape
    NF = wf_ref.shape[1]

    enc = enc_ref[...]                                        # (G, Lp, F), bf16/f32

    # Feat projection: one big MXU matmul (G*Lp rows), f32 accumulation.
    feat = jnp.dot(enc.reshape(G * Lp, F), wf_ref[...],
                   preferred_element_type=jnp.float32)        # (G*Lp, NF) f32
    feat = feat.reshape(G, Lp, NF)

    # hidden_att (+ bf + bh) precomputed per batch element in the wrapper;
    # broadcast over the (sublane) sequence axis.
    att = jnp.maximum(feat + hid_ref[...], 0.0)               # (G, Lp, NF) f32

    # e[g, l] = att[g, l, :] . wv      (bv omitted: softmax is shift-invariant)
    e = jnp.dot(att.reshape(G * Lp, NF), wv_ref[...],
                preferred_element_type=jnp.float32)           # (G*Lp, 1)
    e = e.reshape(G, Lp, 1)

    # Mask padded sequence positions before the softmax.
    if Lp != L:
        pos = lax.broadcasted_iota(jnp.int32, (G, Lp, 1), 1)
        e = jnp.where(pos < L, e, jnp.float32(-1e30))

    # Numerically stable softmax over the sequence (sublane) axis.
    m = jnp.max(e, axis=1, keepdims=True)                     # (G, 1, 1)
    p = jnp.exp(e - m)
    denom = jnp.sum(p, axis=1, keepdims=True)                 # (G, 1, 1)
    alpha = p * pl.reciprocal(denom, approx=True)             # (G, Lp, 1)

    # context[g, f] = sum_l alpha[g, l] * enc[g, l, f]
    # VPU multiply + sublane reduction -> keeps the MXU free of an M=1 matmul.
    ctx = jnp.sum(enc.astype(jnp.float32) * alpha,
                  axis=1, keepdims=True)                      # (G, 1, F) f32

    ctx_ref[...] = ctx
    alpha_ref[...] = alpha


def attention_pallas(encoder_feat, hidden_state, wf, bf, wh, bh, wv, bv,
                     *, mxu_dtype=jnp.bfloat16, rows_per_step=512):
    """Fused forward of the PyTorch `Attention` module.

    encoder_feat : (B, L, feat_dim)
    hidden_state : (B, hidden_dim)
    wf, bf       : feat_att Linear   (torch layout (nf, feat_dim), (nf,))
    wh, bh       : hidden_att Linear (torch layout (nf, hidden_dim), (nf,))
    wv, bv       : v Linear          (torch layout (1, nf), (1,))
    returns (context (B, feat_dim) f32, alpha (B, L) f32)
    """
    B, L, F = encoder_feat.shape
    NF = wf.shape[0]
    f32 = jnp.float32

    # --- trace-time prep (XLA, outside the kernel) --------------------------
    # Hoisted hidden projection: one (B, H) @ (H, NF) matmul at full MXU
    # utilization; both sequence-constant biases folded in.  bv dropped:
    # softmax(e + bv) == softmax(e), so it cannot change either output.
    del bv
    hid_all = (jnp.dot(hidden_state.astype(f32), jnp.transpose(wh).astype(f32))
               + bh.astype(f32) + bf.astype(f32))             # (B, NF)

    Lp = ((L + 127) // 128) * 128                             # lane-aligned seq pad
    G = max(1, min(B, rows_per_step // Lp))                   # batch elems per step
    Bp = ((B + G - 1) // G) * G                               # pad B to multiple of G

    enc_p = jnp.zeros((Bp, Lp, F), mxu_dtype).at[:B, :L, :].set(
        encoder_feat.astype(mxu_dtype))
    hid_p = jnp.zeros((Bp, 1, NF), f32).at[:B, 0, :].set(hid_all)
    wf_t = jnp.transpose(wf).astype(mxu_dtype)                # (F, NF)
    wv_col = jnp.transpose(wv).astype(f32)                    # (NF, 1)

    # Only override the scoped-VMEM limit when the footprint actually needs it
    # (v7x: 64 MiB physical / 32 MiB default scoped limit).
    itm = jnp.dtype(mxu_dtype).itemsize
    vmem_est = (2 * G * Lp * F * itm + 2 * F * NF * itm + 2 * G * NF * 4
                + 2 * NF * 4 + 2 * G * F * 4 + 2 * G * Lp * 4
                + 3 * G * Lp * NF * 4 + G * Lp * F * 4)
    vmem_limit = int(vmem_est * 1.4) if vmem_est * 1.4 > 32 * 1024 * 1024 else None

    kernel = functools.partial(_attention_kernel, L)

    ctx, alpha = pl.pallas_call(
        kernel,
        out_shape=(jax.ShapeDtypeStruct((Bp, 1, F), f32),
                   jax.ShapeDtypeStruct((Bp, Lp, 1), f32)),
        grid=(Bp // G,),
        in_specs=[
            pl.BlockSpec((G, Lp, F), lambda b: (b, 0, 0)),    # encoder_feat tile
            pl.BlockSpec((G, 1, NF), lambda b: (b, 0, 0)),    # hidden_att (+biases)
            pl.BlockSpec((F, NF), lambda b: (0, 0)),          # Wf^T (VMEM resident)
            pl.BlockSpec((NF, 1), lambda b: (0, 0)),          # wv
        ],
        out_specs=(
            pl.BlockSpec((G, 1, F), lambda b: (b, 0, 0)),     # context
            pl.BlockSpec((G, Lp, 1), lambda b: (b, 0, 0)),    # alpha
        ),
        compiler_params=pltpu.CompilerParams(
            dimension_semantics=("parallel",),
            vmem_limit_bytes=vmem_limit),
    )(enc_p, hid_p, wf_t, wv_col)

    return ctx[:B, 0, :], alpha[:B, :L, 0]


def attention_ref(encoder_feat, hidden_state, wf, bf, wh, bh, wv, bv):
    """Pure-JAX f32 reference mirroring the PyTorch forward."""
    feat_att = jnp.einsum("blf,nf->bln", encoder_feat, wf) + bf
    hidden_att = jnp.einsum("bh,nh->bn", hidden_state, wh) + bh
    att = jnp.maximum(feat_att + hidden_att[:, None, :], 0.0)
    e = jnp.einsum("bln,on->blo", att, wv)[..., 0] + bv[0]
    alpha = jax.nn.softmax(e, axis=1)
    context = jnp.sum(encoder_feat * alpha[..., None], axis=1)
    return context, alpha


if __name__ == "__main__":
    key = jax.random.PRNGKey(0)
    B, L, FEAT, HID, NF = 2, 8, 32, 32, 512   # small shapes; nf = module default

    k = jax.random.split(key, 8)
    encoder_feat = jax.random.normal(k[0], (B, L, FEAT), dtype=jnp.float32)
    hidden_state = jax.random.normal(k[1], (B, HID), dtype=jnp.float32)
    # Kaiming-normal-style weights (torch layout (out, in)); small nonzero biases
    # so the bias paths are actually exercised.
    wf = jax.random.normal(k[2], (NF, FEAT), jnp.float32) * jnp.sqrt(2.0 / FEAT)
    wh = jax.random.normal(k[3], (NF, HID), jnp.float32) * jnp.sqrt(2.0 / HID)
    wv = jax.random.normal(k[4], (1, NF), jnp.float32) * jnp.sqrt(2.0 / NF)
    bf = jax.random.normal(k[5], (NF,), jnp.float32) * 0.1
    bh = jax.random.normal(k[6], (NF,), jnp.float32) * 0.1
    bv = jax.random.normal(k[7], (1,), jnp.float32) * 0.1

    ctx_ref, alpha_ref = attention_ref(encoder_feat, hidden_state,
                                       wf, bf, wh, bh, wv, bv)

    # f32 MXU path: tight parity with the f32 reference (approx reciprocal only).
    ctx32, a32 = attention_pallas(encoder_feat, hidden_state, wf, bf, wh, bh,
                                  wv, bv, mxu_dtype=jnp.float32)
    jax.block_until_ready((ctx32, a32))
    assert ctx32.shape == (B, FEAT) and a32.shape == (B, L)
    assert jnp.allclose(ctx32, ctx_ref, rtol=1e-2, atol=1e-2), \
        float(jnp.max(jnp.abs(ctx32 - ctx_ref)))
    assert jnp.allclose(a32, alpha_ref, rtol=1e-2, atol=1e-2), \
        float(jnp.max(jnp.abs(a32 - alpha_ref)))

    # bf16 MXU path (performance default): looser parity (bf16 matmul inputs).
    ctxbf, abf = attention_pallas(encoder_feat, hidden_state, wf, bf, wh, bh,
                                  wv, bv, mxu_dtype=jnp.bfloat16)
    jax.block_until_ready((ctxbf, abf))
    assert ctxbf.shape == (B, FEAT) and abf.shape == (B, L)
    assert jnp.allclose(ctxbf, ctx_ref, rtol=6e-2, atol=6e-2), \
        float(jnp.max(jnp.abs(ctxbf - ctx_ref)))
    assert jnp.allclose(abf, alpha_ref, rtol=6e-2, atol=6e-2), \
        float(jnp.max(jnp.abs(abf - alpha_ref)))
    assert jnp.allclose(jnp.sum(abf, axis=1), 1.0, atol=2e-2)

    print("KERNEL_OK")
</pallas_src>

<mosaic_0001>
module attributes {stable_mosaic.version = 11 : i64} {
  func.func @_attention_kernel(%arg0: i32, %arg1: memref<2x128x32xf32, #tpu.memory_space<vmem>>, %arg2: memref<2x1x512xf32, #tpu.memory_space<vmem>>, %arg3: memref<32x512xf32, #tpu.memory_space<vmem>>, %arg4: memref<512x1xf32, #tpu.memory_space<vmem>>, %arg5: memref<2x1x32xf32, #tpu.memory_space<vmem>>, %arg6: memref<2x128x1xf32, #tpu.memory_space<vmem>>) attributes {dimension_semantics = [#tpu.dimension_semantics<parallel>], iteration_bounds = array<i64: 1>, scalar_prefetch = 0 : i64, scratch_operands = 0 : i64, tpu.core_type = #tpu.core_type<tc>, window_params = [{transform_indices = @transform_0, window_bounds = array<i64: 2, 128, 32>}, {transform_indices = @transform_1, window_bounds = array<i64: 2, 1, 512>}, {pipeline_mode = #tpu.pipeline_mode<synchronous>, transform_indices = @transform_2, window_bounds = array<i64: 32, 512>}, {pipeline_mode = #tpu.pipeline_mode<synchronous>, transform_indices = @transform_3, window_bounds = array<i64: 512, 1>}, {transform_indices = @transform_4, window_bounds = array<i64: 2, 1, 32>}, {transform_indices = @transform_5, window_bounds = array<i64: 2, 128, 1>}]} {
    %c0 = arith.constant 0 : index
    %c0_0 = arith.constant 0 : index
    %c0_1 = arith.constant 0 : index
    %0 = vector.load %arg1[%c0, %c0_0, %c0_1] : memref<2x128x32xf32, #tpu.memory_space<vmem>>, vector<2x128x32xf32>
    %1 = vector.shape_cast %0 : vector<2x128x32xf32> to vector<256x32xf32>
    %c0_2 = arith.constant 0 : index
    %c0_3 = arith.constant 0 : index
    %2 = vector.load %arg3[%c0_2, %c0_3] : memref<32x512xf32, #tpu.memory_space<vmem>>, vector<32x512xf32>
    %cst = arith.constant dense<0.000000e+00> : vector<256x512xf32>
    %3 = tpu.matmul %1, %2, %cst {dimension_numbers = #tpu.dot_dimension_numbers<[1], [0], [0], [1], [0, 0, 1, 1], [], []>} : vector<256x32xf32>, vector<32x512xf32>, vector<256x512xf32> -> vector<256x512xf32>
    %4 = vector.shape_cast %3 : vector<256x512xf32> to vector<2x128x512xf32>
    %c0_4 = arith.constant 0 : index
    %c0_5 = arith.constant 0 : index
    %c0_6 = arith.constant 0 : index
    %5 = vector.load %arg2[%c0_4, %c0_5, %c0_6] : memref<2x1x512xf32, #tpu.memory_space<vmem>>, vector<2x1x512xf32>
    %6 = vector.broadcast %5 : vector<2x1x512xf32> to vector<2x128x512xf32>
    %7 = arith.addf %4, %6 : vector<2x128x512xf32>
    %cst_7 = arith.constant 0.000000e+00 : f32
    %8 = vector.broadcast %cst_7 : f32 to vector<2x128x512xf32>
    %9 = arith.maximumf %7, %8 : vector<2x128x512xf32>
    %10 = vector.shape_cast %9 : vector<2x128x512xf32> to vector<256x512xf32>
    %c0_8 = arith.constant 0 : index
    %c0_9 = arith.constant 0 : index
    %11 = vector.load %arg4[%c0_8, %c0_9] : memref<512x1xf32, #tpu.memory_space<vmem>>, vector<512x1xf32>
    %cst_10 = arith.constant dense<0.000000e+00> : vector<256x1xf32>
    %12 = tpu.matmul %10, %11, %cst_10 {dimension_numbers = #tpu.dot_dimension_numbers<[1], [0], [0], [1], [0, 0, 1, 1], [], []>} : vector<256x512xf32>, vector<512x1xf32>, vector<256x1xf32> -> vector<256x1xf32>
    %13 = vector.shape_cast %12 : vector<256x1xf32> to vector<2x128x1xf32>
    %14 = tpu.iota {dimensions = array<i32: 1>} : vector<2x128x1xi32>
    %c8_i32 = arith.constant 8 : i32
    %15 = vector.broadcast %c8_i32 : i32 to vector<2x128x1xi32>
    %16 = arith.cmpi slt, %14, %15 : vector<2x128x1xi32>
    %cst_11 = arith.constant -1.000000e+30 : f32
    %17 = vector.broadcast %cst_11 : f32 to vector<2x128x1xf32>
    %18 = arith.select %16, %13, %17 : vector<2x128x1xi1>, vector<2x128x1xf32>
    %cst_12 = arith.constant dense<0xFF800000> : vector<2x1xf32>
    %19 = vector.multi_reduction <maximumf>, %18, %cst_12 [1] : vector<2x128x1xf32> to vector<2x1xf32>
    %20 = vector.shape_cast %19 : vector<2x1xf32> to vector<2x1x1xf32>
    %21 = vector.broadcast %20 : vector<2x1x1xf32> to vector<2x128x1xf32>
    %22 = arith.subf %18, %21 : vector<2x128x1xf32>
    %23 = math.exp %22 : vector<2x128x1xf32>
    %cst_13 = arith.constant dense<0.000000e+00> : vector<2x1xf32>
    %24 = vector.multi_reduction <add>, %23, %cst_13 [1] : vector<2x128x1xf32> to vector<2x1xf32>
    %25 = vector.shape_cast %24 : vector<2x1xf32> to vector<2x1x1xf32>
    %26 = tpu.reciprocal %25 {approx = true} : vector<2x1x1xf32> -> vector<2x1x1xf32>
    %27 = vector.broadcast %26 : vector<2x1x1xf32> to vector<2x128x1xf32>
    %28 = arith.mulf %23, %27 : vector<2x128x1xf32>
    %29 = vector.broadcast %28 : vector<2x128x1xf32> to vector<2x128x32xf32>
    %30 = arith.mulf %0, %29 : vector<2x128x32xf32>
    %cst_14 = arith.constant dense<0.000000e+00> : vector<2x32xf32>
    %31 = vector.multi_reduction <add>, %30, %cst_14 [1] : vector<2x128x32xf32> to vector<2x32xf32>
    %32 = vector.shape_cast %31 : vector<2x32xf32> to vector<2x1x32xf32>
    %c0_15 = arith.constant 0 : index
    %c0_16 = arith.constant 0 : index
    %c0_17 = arith.constant 0 : index
    %33 = vector.load %arg5[%c0_15, %c0_16, %c0_17] : memref<2x1x32xf32, #tpu.memory_space<vmem>>, vector<2x1x32xf32>
    tpu.vector_store %arg5[%c0_15, %c0_16, %c0_17], %32 {strides = array<i32>} : memref<2x1x32xf32, #tpu.memory_space<vmem>>, vector<2x1x32xf32>,
    %c0_18 = arith.constant 0 : index
    %c0_19 = arith.constant 0 : index
    %c0_20 = arith.constant 0 : index
    %34 = vector.load %arg6[%c0_18, %c0_19, %c0_20] : memref<2x128x1xf32, #tpu.memory_space<vmem>>, vector<2x128x1xf32>
    tpu.vector_store %arg6[%c0_18, %c0_19, %c0_20], %28 {strides = array<i32>} : memref<2x128x1xf32, #tpu.memory_space<vmem>>, vector<2x128x1xf32>,
    return
  }
  func.func @transform_0(%arg0: i32) -> (i32, i32, i32) {
    %c0_i32 = arith.constant 0 : i32
    %c0_i32_0 = arith.constant 0 : i32
    %c0_i32_1 = arith.constant 0 : i32
    return %arg0, %c0_i32, %c0_i32_0 : i32, i32, i32
  }
  func.func @transform_1(%arg0: i32) -> (i32, i32, i32) {
    %c0_i32 = arith.constant 0 : i32
    %c0_i32_0 = arith.constant 0 : i32
    %c0_i32_1 = arith.constant 0 : i32
    return %arg0, %c0_i32, %c0_i32_0 : i32, i32, i32
  }
  func.func @transform_2(%arg0: i32) -> (i32, i32) {
    %c0_i32 = arith.constant 0 : i32
    %c0_i32_0 = arith.constant 0 : i32
    %c0_i32_1 = arith.constant 0 : i32
    return %c0_i32, %c0_i32_0 : i32, i32
  }
  func.func @transform_3(%arg0: i32) -> (i32, i32) {
    %c0_i32 = arith.constant 0 : i32
    %c0_i32_0 = arith.constant 0 : i32
    %c0_i32_1 = arith.constant 0 : i32
    return %c0_i32, %c0_i32_0 : i32, i32
  }
  func.func @transform_4(%arg0: i32) -> (i32, i32, i32) {
    %c0_i32 = arith.constant 0 : i32
    %c0_i32_0 = arith.constant 0 : i32
    %c0_i32_1 = arith.constant 0 : i32
    return %arg0, %c0_i32, %c0_i32_0 : i32, i32, i32
  }
  func.func @transform_5(%arg0: i32) -> (i32, i32, i32) {
    %c0_i32 = arith.constant 0 : i32
    %c0_i32_0 = arith.constant 0 : i32
    %c0_i32_1 = arith.constant 0 : i32
    return %arg0, %c0_i32, %c0_i32_0 : i32, i32, i32
  }
}

</mosaic_0001>

<llo_original>
// kernel: tpu_custom_call.1
$region0: #{tpu_custom_call.1}
  #allocation0 [shape = 'u32[]', space=smem, size = 0x4, offset = 0x4, fixed_abs, tag = 'smem constant byte address 0x4 - core index']
  #allocation1 [shape = 'u32[144,128]{1,0:T(1,128)}', space=vmem, size = 0x12000, scoped, tag = 'internal scratch']
  %s0 = inlined_call_operand.vmem [shape: f32[2,128,32], index: 0, kind: input, shape index: {}]
  %s1 = inlined_call_operand.vmem [shape: f32[2,1,512], index: 1, kind: input, shape index: {}]
  %s2 = inlined_call_operand.vmem [shape: f32[32,512], index: 2, kind: input, shape index: {}]
  %s3 = inlined_call_operand.vmem [shape: f32[512,1], index: 3, kind: input, shape index: {}]
  %s4 = inlined_call_operand.hbm [shape: f32[2,1,32], index: 4, kind: output, shape index: {0}]
  %s5 = inlined_call_operand.vmem [shape: f32[2,128,1], index: 5, kind: output, shape index: {1}]
  %6 = xla_tuple %s4, %s5
  %s7 = sld [smem:[#allocation0]]
  $region34: #{tpu_custom_call.1} parent=0
    _
  %s9 = ssub.s32 1, %s7
  %s10 = scalar_select 0, %s9, %s7
  $region1: #{tpu_custom_call.1} parent=0
    #allocation2 [shape = 'u8[1024]{0}', space=vmem, size = 0x400, scoped, tag = 'output window, operand 0, single buffered']
    #allocation3 [shape = 's32[1]{0}', space=sflag, size = 0x4, scoped, tag = 'scoped memory for tpu_custom_call.1']
    %11 = vsyncpa [#allocation3], 0
    // Predicated region
    $region2: #{tpu_custom_call.1} parent=1 // pred_check
      _
    $region3: #{tpu_custom_call.1} parent=1 // pred_check_branch
      %13 = sbr.rel (0) target = $region5
    $region4: #{tpu_custom_call.1} parent=1 // pred_region
      _
    $region5: #{tpu_custom_call.1} parent=1 // pred_fallthru
      _
    // Predicated region
    $region6: #{tpu_custom_call.1} parent=1 // pred_check
      _
    $region7: #{tpu_custom_call.1} parent=1 // pred_check_branch
      %15 = sbr.rel (0) target = $region9
    $region8: #{tpu_custom_call.1} parent=1 // pred_region
      _
    $region9: #{tpu_custom_call.1} parent=1 // pred_fallthru
      _
    // Predicated region
    $region10: #{tpu_custom_call.1} parent=1 // pred_check
      _
    $region11: #{tpu_custom_call.1} parent=1 // pred_check_branch
      %17 = sbr.rel (0) target = $region13
    $region12: #{tpu_custom_call.1} parent=1 // pred_region
      _
    $region13: #{tpu_custom_call.1} parent=1 // pred_fallthru
      _
    // Predicated region
    $region14: #{tpu_custom_call.1} parent=1 // pred_check
      _
    $region15: #{tpu_custom_call.1} parent=1 // pred_check_branch
      %19 = sbr.rel (0) target = $region17
    $region16: #{tpu_custom_call.1} parent=1 // pred_region
      _
    $region17: #{tpu_custom_call.1} parent=1 // pred_fallthru
      _
    %v20 = vld [vmem:[%s0] sm:$0xff]
    %v21 = vld [vmem:[%s0 + $0x8] sm:$0xff]
    %v22 = vld [vmem:[%s0 + $0x10] sm:$0xff]
    %v23 = vld [vmem:[%s0 + $0x18] sm:$0xff]
    %v24 = vld [vmem:[%s0 + $0x20] sm:$0xff]
    %v25 = vld [vmem:[%s0 + $0x28] sm:$0xff]
    %v26 = vld [vmem:[%s0 + $0x30] sm:$0xff]
    %v27 = vld [vmem:[%s0 + $0x38] sm:$0xff]
    %v28 = vld [vmem:[%s0 + $0x40] sm:$0xff]
    %v29 = vld [vmem:[%s0 + $0x48] sm:$0xff]
    %v30 = vld [vmem:[%s0 + $0x50] sm:$0xff]
    %v31 = vld [vmem:[%s0 + $0x58] sm:$0xff]
    %v32 = vld [vmem:[%s0 + $0x60] sm:$0xff]
    %v33 = vld [vmem:[%s0 + $0x68] sm:$0xff]
    %v34 = vld [vmem:[%s0 + $0x70] sm:$0xff]
    %v35 = vld [vmem:[%s0 + $0x78] sm:$0xff]
    %v36 = vld [vmem:[%s0 + $0x80] sm:$0xff]
    %v37 = vld [vmem:[%s0 + $0x88] sm:$0xff]
    %v38 = vld [vmem:[%s0 + $0x90] sm:$0xff]
    %v39 = vld [vmem:[%s0 + $0x98] sm:$0xff]
    %v40 = vld [vmem:[%s0 + $0xa0] sm:$0xff]
    %v41 = vld [vmem:[%s0 + $0xa8] sm:$0xff]
    %v42 = vld [vmem:[%s0 + $0xb0] sm:$0xff]
    %v43 = vld [vmem:[%s0 + $0xb8] sm:$0xff]
    %v44 = vld [vmem:[%s0 + $0xc0] sm:$0xff]
    %v45 = vld [vmem:[%s0 + $0xc8] sm:$0xff]
    %v46 = vld [vmem:[%s0 + $0xd0] sm:$0xff]
    %v47 = vld [vmem:[%s0 + $0xd8] sm:$0xff]
    %v48 = vld [vmem:[%s0 + $0xe0] sm:$0xff]
    %v49 = vld [vmem:[%s0 + $0xe8] sm:$0xff]
    %v50 = vld [vmem:[%s0 + $0xf0] sm:$0xff]
    %v51 = vld [vmem:[%s0 + $0xf8] sm:$0xff]
    %v52 = vld [vmem:[%s2] sm:$0xff]
    %v53 = vld [vmem:[%s2 + $0x8] sm:$0xff]
    %v54 = vld [vmem:[%s2 + $0x10] sm:$0xff]
    %v55 = vld [vmem:[%s2 + $0x18] sm:$0xff]
    %v56 = vld [vmem:[%s2 + $0x20] sm:$0xff]
    %v57 = vld [vmem:[%s2 + $0x28] sm:$0xff]
    %v58 = vld [vmem:[%s2 + $0x30] sm:$0xff]
    %v59 = vld [vmem:[%s2 + $0x38] sm:$0xff]
    %v60 = vld [vmem:[%s2 + $0x40] sm:$0xff]
    %v61 = vld [vmem:[%s2 + $0x48] sm:$0xff]
    %v62 = vld [vmem:[%s2 + $0x50] sm:$0xff]
    %v63 = vld [vmem:[%s2 + $0x58] sm:$0xff]
    %v64 = vld [vmem:[%s2 + $0x60] sm:$0xff]
    %v65 = vld [vmem:[%s2 + $0x68] sm:$0xff]
    %v66 = vld [vmem:[%s2 + $0x70] sm:$0xff]
    %v67 = vld [vmem:[%s2 + $0x78] sm:$0xff]
    %vm68 = vcmask 261120
    %v70 = vsel %vm68, %v20, 0
    %v73 = vsel %vm68, %v21, 0
    %v76 = vsel %vm68, %v22, 0
    %v79 = vsel %vm68, %v23, 0
    %v82 = vsel %vm68, %v24, 0
    %v85 = vsel %vm68, %v25, 0
    %v88 = vsel %vm68, %v26, 0
    %v91 = vsel %vm68, %v27, 0
    %v94 = vsel %vm68, %v28, 0
    %v97 = vsel %vm68, %v29, 0
    %v100 = vsel %vm68, %v30, 0
    %v103 = vsel %vm68, %v31, 0
    %v106 = vsel %vm68, %v32, 0
    %v109 = vsel %vm68, %v33, 0
    %v112 = vsel %vm68, %v34, 0
    %v115 = vsel %vm68, %v35, 0
    %v118 = vsel %vm68, %v36, 0
    %v121 = vsel %vm68, %v37, 0
    %v124 = vsel %vm68, %v38, 0
    %v127 = vsel %vm68, %v39, 0
    %v130 = vsel %vm68, %v40, 0
    %v133 = vsel %vm68, %v41, 0
    %v136 = vsel %vm68, %v42, 0
    %v139 = vsel %vm68, %v43, 0
    %v142 = vsel %vm68, %v44, 0
    %v145 = vsel %vm68, %v45, 0
    %v148 = vsel %vm68, %v46, 0
    %v151 = vsel %vm68, %v47, 0
    %v154 = vsel %vm68, %v48, 0
    %v157 = vsel %vm68, %v49, 0
    %v160 = vsel %vm68, %v50, 0
    %v163 = vsel %vm68, %v51, 0
    %165 = vmatprep.subr.mxu0 %v53
    %166 = vmatpush1.msra.mxu0 %v52
    %167 = vmatprep.subr.mxu0 %v57
    %168 = vmatpush1.msra.mxu0 %v56
    %169 = vmatprep.subr.mxu0 %v61
    %170 = vmatpush1.msra.mxu0 %v60
    %171 = vmatprep.subr.mxu0 %v65
    %172 = vmatpush1.msra.mxu0 %v64
    %173 = vmatprep.subr.mxu0 0.0
    %174 = vmatpush1.msra.mxu0 0.0
    %175 = vmatprep.subr.mxu0 0.0
    %176 = vmatpush1.msra.mxu0 0.0
    %177 = vmatprep.subr.mxu0 0.0
    %178 = vmatpush1.msra.mxu0 0.0
    %179 = vmatprep.subr.mxu0 0.0
    %180 = vmatpush1.msra.mxu0 0.0
    %181 = vmatprep.subr.mxu0 0.0
    %182 = vmatpush1.msra.mxu0 0.0
    %183 = vmatprep.subr.mxu0 0.0
    %184 = vmatpush1.msra.mxu0 0.0
    %185 = vmatprep.subr.mxu0 0.0
    %186 = vmatpush1.msra.mxu0 0.0
    %187 = vmatprep.subr.mxu0 0.0
    %188 = vmatpush1.msra.mxu0 0.0
    %189 = vmatprep.subr.mxu0 0.0
    %190 = vmatpush1.msra.mxu0 0.0
    %191 = vmatprep.subr.mxu0 0.0
    %192 = vmatpush1.msra.mxu0 0.0
    %193 = vmatprep.subr.mxu0 0.0
    %194 = vmatpush1.msra.mxu0 0.0
    %195 = vmatprep.subr.mxu0 0.0
    %196 = vmatpush1.msra.mxu0 0.0
    %197 = vmatprep.subr.mxu0 0.0
    %198 = vmatpush1.msra.mxu0 0.0
    %199 = vmatprep.subr.mxu0 0.0
    %200 = vmatpush1.msra.mxu0 0.0
    %201 = vmatprep.subr.mxu0 0.0
    %202 = vmatpush1.msra.mxu0 0.0
    %203 = vmatprep.subr.mxu0 0.0
    %204 = vmatpush1.msra.mxu0 0.0
    %205 = vmatprep.subr.mxu0 0.0
    %206 = vmatpush1.msra.mxu0 0.0
    %207 = vmatprep.subr.mxu0 0.0
    %208 = vmatpush1.msra.mxu0 0.0
    %209 = vmatprep.subr.mxu0 0.0
    %210 = vmatpush1.msra.mxu0 0.0
    %211 = vmatprep.subr.mxu0 0.0
    %212 = vmatpush1.msra.mxu0 0.0
    %213 = vmatprep.subr.mxu0 0.0
    %214 = vmatpush1.msra.mxu0 0.0
    %215 = vmatprep.subr.mxu0 0.0
    %216 = vmatpush1.msra.mxu0 0.0
    %217 = vmatprep.subr.mxu0 0.0
    %218 = vmatpush1.msra.mxu0 0.0
    %219 = vmatprep.subr.mxu0 0.0
    %220 = vmatpush1.msra.mxu0 0.0
    %221 = vmatprep.subr.mxu0 0.0
    %222 = vmatpush1.msra.mxu0 0.0
    %223 = vmatprep.subr.mxu0 0.0
    %224 = vmatpush1.msra.mxu0 0.0
    %225 = vmatprep.subr.mxu0 0.0
    %226 = vmatpush1.msra.mxu0 0.0
    %227 = vmatprep.subr.mxu0 0.0
    %228 = vmatpush1.msra.mxu0 0.0
    %229 = vmatprep.mubr.f32.mxu0 0.0
    %230 = vmatmul.mubr.f32.gmra.mrb[0].mxu0 %v70
    %v231 = vpop.f32.mrb[0].mxu0
    %v232 = vadd.f32 0.0, %v231
    %v233 = vpop.f32.mrb[0].mxu0
    %v234 = vadd.f32 0.0, %v233
    %235 = vmatprep.mubr.f32.mxu0 0.0
    %236 = vmatmul.mubr.f32.gmra.mrb[0].mxu0 %v73
    %v237 = vpop.f32.mrb[0].mxu0
    %v238 = vadd.f32 0.0, %v237
    %v239 = vpop.f32.mrb[0].mxu0
    %v240 = vadd.f32 0.0, %v239
    %241 = vmatprep.mubr.f32.mxu0 0.0
    %242 = vmatmul.mubr.f32.gmra.mrb[0].mxu0 %v76
    %v243 = vpop.f32.mrb[0].mxu0
    %v244 = vadd.f32 0.0, %v243
    %v245 = vpop.f32.mrb[0].mxu0
    %v246 = vadd.f32 0.0, %v245
    %247 = vmatprep.mubr.f32.mxu0 0.0
    %248 = vmatmul.mubr.f32.gmra.mrb[0].mxu0 %v79
    %v249 = vpop.f32.mrb[0].mxu0
    %v250 = vadd.f32 0.0, %v249
    %v251 = vpop.f32.mrb[0].mxu0
    %v252 = vadd.f32 0.0, %v251
    %253 = vmatprep.mubr.f32.mxu0 0.0
    %254 = vmatmul.mubr.f32.gmra.mrb[0].mxu0 %v82
    %v255 = vpop.f32.mrb[0].mxu0
    %v256 = vadd.f32 0.0, %v255
    %v257 = vpop.f32.mrb[0].mxu0
    %v258 = vadd.f32 0.0, %v257
    %259 = vmatprep.mubr.f32.mxu0 0.0
    %260 = vmatmul.mubr.f32.gmra.mrb[0].mxu0 %v85
    %v261 = vpop.f32.mrb[0].mxu0
    %v262 = vadd.f32 0.0, %v261
    %v263 = vpop.f32.mrb[0].mxu0
    %v264 = vadd.f32 0.0, %v263
    %265 = vmatprep.mubr.f32.mxu0 0.0
    %266 = vmatmul.mubr.f32.gmra.mrb[0].mxu0 %v88
    %v267 = vpop.f32.mrb[0].mxu0
    %v268 = vadd.f32 0.0, %v267
    %v269 = vpop.f32.mrb[0].mxu0
    %v270 = vadd.f32 0.0, %v269
    %271 = vmatprep.mubr.f32.mxu0 0.0
    %272 = vmatmul.mubr.f32.gmra.mrb[0].mxu0 %v91
    %v273 = vpop.f32.mrb[0].mxu0
    %v274 = vadd.f32 0.0, %v273
    %v275 = vpop.f32.mrb[0].mxu0
    %v276 = vadd.f32 0.0, %v275
    %277 = vmatprep.mubr.f32.mxu0 0.0
    %278 = vmatmul.mubr.f32.gmra.mrb[0].mxu0 %v94
    %v279 = vpop.f32.mrb[0].mxu0
    %v280 = vadd.f32 0.0, %v279
    %v281 = vpop.f32.mrb[0].mxu0
    %v282 = vadd.f32 0.0, %v281
    %283 = vmatprep.mubr.f32.mxu0 0.0
    %284 = vmatmul.mubr.f32.gmra.mrb[0].mxu0 %v97
    %v285 = vpop.f32.mrb[0].mxu0
    %v286 = vadd.f32 0.0, %v285
    %v287 = vpop.f32.mrb[0].mxu0
    %v288 = vadd.f32 0.0, %v287
    %289 = vmatprep.mubr.f32.mxu0 0.0
    %290 = vmatmul.mubr.f32.gmra.mrb[0].mxu0 %v100
    %v291 = vpop.f32.mrb[0].mxu0
    %v292 = vadd.f32 0.0, %v291
    %v293 = vpop.f32.mrb[0].mxu0
    %v294 = vadd.f32 0.0, %v293
    %295 = vmatprep.mubr.f32.mxu0 0.0
    %296 = vmatmul.mubr.f32.gmra.mrb[0].mxu0 %v103
    %v297 = vpop.f32.mrb[0].mxu0
    %v298 = vadd.f32 0.0, %v297
    %v299 = vpop.f32.mrb[0].mxu0
    %v300 = vadd.f32 0.0, %v299
    %301 = vmatprep.mubr.f32.mxu0 0.0
    %302 = vmatmul.mubr.f32.gmra.mrb[0].mxu0 %v106
    %v303 = vpop.f32.mrb[0].mxu0
    %v304 = vadd.f32 0.0, %v303
    %v305 = vpop.f32.mrb[0].mxu0
    %v306 = vadd.f32 0.0, %v305
    %307 = vmatprep.mubr.f32.mxu0 0.0
    %308 = vmatmul.mubr.f32.gmra.mrb[0].mxu0 %v109
    %v309 = vpop.f32.mrb[0].mxu0
    %v310 = vadd.f32 0.0, %v309
    %v311 = vpop.f32.mrb[0].mxu0
    %v312 = vadd.f32 0.0, %v311
    %313 = vmatprep.mubr.f32.mxu0 0.0
    %314 = vmatmul.mubr.f32.gmra.mrb[0].mxu0 %v112
    %v315 = vpop.f32.mrb[0].mxu0
    %v316 = vadd.f32 0.0, %v315
    %v317 = vpop.f32.mrb[0].mxu0
    %v318 = vadd.f32 0.0, %v317
    %319 = vmatprep.mubr.f32.mxu0 0.0
    %320 = vmatmul.mubr.f32.gmra.mrb[0].mxu0 %v115
    %v321 = vpop.f32.mrb[0].mxu0
    %v322 = vadd.f32 0.0, %v321
    %v323 = vpop.f32.mrb[0].mxu0
    %v324 = vadd.f32 0.0, %v323
    %325 = vmatprep.mubr.f32.mxu0 0.0
    %326 = vmatmul.mubr.f32.gmra.mrb[0].mxu0 %v118
    %v327 = vpop.f32.mrb[0].mxu0
    %v328 = vadd.f32 0.0, %v327
    %v329 = vpop.f32.mrb[0].mxu0
    %v330 = vadd.f32 0.0, %v329
    %331 = vmatprep.mubr.f32.mxu0 0.0
    %332 = vmatmul.mubr.f32.gmra.mrb[0].mxu0 %v121
    %v333 = vpop.f32.mrb[0].mxu0
    %v334 = vadd.f32 0.0, %v333
    %v335 = vpop.f32.mrb[0].mxu0
    %v336 = vadd.f32 0.0, %v335
    %337 = vmatprep.mubr.f32.mxu0 0.0
    %338 = vmatmul.mubr.f32.gmra.mrb[0].mxu0 %v124
    %v339 = vpop.f32.mrb[0].mxu0
    %v340 = vadd.f32 0.0, %v339
    %v341 = vpop.f32.mrb[0].mxu0
    %v342 = vadd.f32 0.0, %v341
    %343 = vmatprep.mubr.f32.mxu0 0.0
    %344 = vmatmul.mubr.f32.gmra.mrb[0].mxu0 %v127
    %v345 = vpop.f32.mrb[0].mxu0
    %v346 = vadd.f32 0.0, %v345
    %v347 = vpop.f32.mrb[0].mxu0
    %v348 = vadd.f32 0.0, %v347
    %349 = vmatprep.mubr.f32.mxu0 0.0
    %350 = vmatmul.mubr.f32.gmra.mrb[0].mxu0 %v130
    %v351 = vpop.f32.mrb[0].mxu0
    %v352 = vadd.f32 0.0, %v351
    %v353 = vpop.f32.mrb[0].mxu0
    %v354 = vadd.f32 0.0, %v353
    %355 = vmatprep.mubr.f32.mxu0 0.0
    %356 = vmatmul.mubr.f32.gmra.mrb[0].mxu0 %v133
    %v357 = vpop.f32.mrb[0].mxu0
    %v358 = vadd.f32 0.0, %v357
    %v359 = vpop.f32.mrb[0].mxu0
    %v360 = vadd.f32 0.0, %v359
    %361 = vmatprep.mubr.f32.mxu0 0.0
    %362 = vmatmul.mubr.f32.gmra.mrb[0].mxu0 %v136
    %v363 = vpop.f32.mrb[0].mxu0
    %v364 = vadd.f32 0.0, %v363
    %v365 = vpop.f32.mrb[0].mxu0
    %v366 = vadd.f32 0.0, %v365
    %367 = vmatprep.mubr.f32.mxu0 0.0
    %368 = vmatmul.mubr.f32.gmra.mrb[0].mxu0 %v139
    %v369 = vpop.f32.mrb[0].mxu0
    %v370 = vadd.f32 0.0, %v369
    %v371 = vpop.f32.mrb[0].mxu0
    %v372 = vadd.f32 0.0, %v371
    %373 = vmatprep.mubr.f32.mxu0 0.0
    %374 = vmatmul.mubr.f32.gmra.mrb[0].mxu0 %v142
    %v375 = vpop.f32.mrb[0].mxu0
    %v376 = vadd.f32 0.0, %v375
    %v377 = vpop.f32.mrb[0].mxu0
    %v378 = vadd.f32 0.0, %v377
    %379 = vmatprep.mubr.f32.mxu0 0.0
    %380 = vmatmul.mubr.f32.gmra.mrb[0].mxu0 %v145
    %v381 = vpop.f32.mrb[0].mxu0
    %v382 = vadd.f32 0.0, %v381
    %v383 = vpop.f32.mrb[0].mxu0
    %v384 = vadd.f32 0.0, %v383
    %385 = vmatprep.mubr.f32.mxu0 0.0
    %386 = vmatmul.mubr.f32.gmra.mrb[0].mxu0 %v148
    %v387 = vpop.f32.mrb[0].mxu0
    %v388 = vadd.f32 0.0, %v387
    %v389 = vpop.f32.mrb[0].mxu0
    %v390 = vadd.f32 0.0, %v389
    %391 = vmatprep.mubr.f32.mxu0 0.0
    %392 = vmatmul.mubr.f32.gmra.mrb[0].mxu0 %v151
    %v393 = vpop.f32.mrb[0].mxu0
    %v394 = vadd.f32 0.0, %v393
    %v395 = vpop.f32.mrb[0].mxu0
    %v396 = vadd.f32 0.0, %v395
    %397 = vmatprep.mubr.f32.mxu0 0.0
    %398 = vmatmul.mubr.f32.gmra.mrb[0].mxu0 %v154
    %v399 = vpop.f32.mrb[0].mxu0
    %v400 = vadd.f32 0.0, %v399
    %v401 = vpop.f32.mrb[0].mxu0
    %v402 = vadd.f32 0.0, %v401
    %403 = vmatprep.mubr.f32.mxu0 0.0
    %404 = vmatmul.mubr.f32.gmra.mrb[0].mxu0 %v157
    %v405 = vpop.f32.mrb[0].mxu0
    %v406 = vadd.f32 0.0, %v405
    %v407 = vpop.f32.mrb[0].mxu0
    %v408 = vadd.f32 0.0, %v407
    %409 = vmatprep.mubr.f32.mxu0 0.0
    %410 = vmatmul.mubr.f32.gmra.mrb[0].mxu0 %v160
    %v411 = vpop.f32.mrb[0].mxu0
    %v412 = vadd.f32 0.0, %v411
    %v413 = vpop.f32.mrb[0].mxu0
    %v414 = vadd.f32 0.0, %v413
    %415 = vmatprep.mubr.f32.mxu0 0.0
    %416 = vmatmul.mubr.f32.gmra.mrb[0].mxu0 %v163
    %v417 = vpop.f32.mrb[0].mxu0
    %v418 = vadd.f32 0.0, %v417
    %v419 = vpop.f32.mrb[0].mxu0
    %v420 = vadd.f32 0.0, %v419
    %421 = vdwg.mxu0
    %422 = vmatprep.subr.mxu0 %v55
    %423 = vmatpush1.msra.mxu0 %v54
    %424 = vmatprep.subr.mxu0 %v59
    %425 = vmatpush1.msra.mxu0 %v58
    %426 = vmatprep.subr.mxu0 %v63
    %427 = vmatpush1.msra.mxu0 %v62
    %428 = vmatprep.subr.mxu0 %v67
    %429 = vmatpush1.msra.mxu0 %v66
    %430 = vmatprep.subr.mxu0 0.0
    %431 = vmatpush1.msra.mxu0 0.0
    %432 = vmatprep.subr.mxu0 0.0
    %433 = vmatpush1.msra.mxu0 0.0
    %434 = vmatprep.subr.mxu0 0.0
    %435 = vmatpush1.msra.mxu0 0.0
    %436 = vmatprep.subr.mxu0 0.0
    %437 = vmatpush1.msra.mxu0 0.0
    %438 = vmatprep.subr.mxu0 0.0
    %439 = vmatpush1.msra.mxu0 0.0
    %440 = vmatprep.subr.mxu0 0.0
    %441 = vmatpush1.msra.mxu0 0.0
    %442 = vmatprep.subr.mxu0 0.0
    %443 = vmatpush1.msra.mxu0 0.0
    %444 = vmatprep.subr.mxu0 0.0
    %445 = vmatpush1.msra.mxu0 0.0
    %446 = vmatprep.subr.mxu0 0.0
    %447 = vmatpush1.msra.mxu0 0.0
    %448 = vmatprep.subr.mxu0 0.0
    %449 = vmatpush1.msra.mxu0 0.0
    %450 = vmatprep.subr.mxu0 0.0
    %451 = vmatpush1.msra.mxu0 0.0
    %452 = vmatprep.subr.mxu0 0.0
    %453 = vmatpush1.msra.mxu0 0.0
    %454 = vmatprep.subr.mxu0 0.0
    %455 = vmatpush1.msra.mxu0 0.0
    %456 = vmatprep.subr.mxu0 0.0
    %457 = vmatpush1.msra.mxu0 0.0
    %458 = vmatprep.subr.mxu0 0.0
    %459 = vmatpush1.msra.mxu0 0.0
    %460 = vmatprep.subr.mxu0 0.0
    %461 = vmatpush1.msra.mxu0 0.0
    %462 = vmatprep.subr.mxu0 0.0
    %463 = vmatpush1.msra.mxu0 0.0
    %464 = vmatprep.subr.mxu0 0.0
    %465 = vmatpush1.msra.mxu0 0.0
    %466 = vmatprep.subr.mxu0 0.0
    %467 = vmatpush1.msra.mxu0 0.0
    %468 = vmatprep.subr.mxu0 0.0
    %469 = vmatpush1.msra.mxu0 0.0
    %470 = vmatprep.subr.mxu0 0.0
    %471 = vmatpush1.msra.mxu0 0.0
    %472 = vmatprep.subr.mxu0 0.0
    %473 = vmatpush1.msra.mxu0 0.0
    %474 = vmatprep.subr.mxu0 0.0
    %475 = vmatpush1.msra.mxu0 0.0
    %476 = vmatprep.subr.mxu0 0.0
    %477 = vmatpush1.msra.mxu0 0.0
    %478 = vmatprep.subr.mxu0 0.0
    %479 = vmatpush1.msra.mxu0 0.0
    %480 = vmatprep.subr.mxu0 0.0
    %481 = vmatpush1.msra.mxu0 0.0
    %482 = vmatprep.subr.mxu0 0.0
    %483 = vmatpush1.msra.mxu0 0.0
    %484 = vmatprep.subr.mxu0 0.0
    %485 = vmatpush1.msra.mxu0 0.0
    %486 = vmatprep.mubr.f32.mxu0 0.0
    %487 = vmatmul.mubr.f32.gmra.mrb[0].mxu0 %v70
    %v488 = vpop.f32.mrb[0].mxu0
    %v489 = vadd.f32 0.0, %v488
    %v490 = vpop.f32.mrb[0].mxu0
    %v491 = vadd.f32 0.0, %v490
    %492 = vmatprep.mubr.f32.mxu0 0.0
    %493 = vmatmul.mubr.f32.gmra.mrb[0].mxu0 %v73
    %v494 = vpop.f32.mrb[0].mxu0
    %v495 = vadd.f32 0.0, %v494
    %v496 = vpop.f32.mrb[0].mxu0
    %v497 = vadd.f32 0.0, %v496
    %498 = vmatprep.mubr.f32.mxu0 0.0
    %499 = vmatmul.mubr.f32.gmra.mrb[0].mxu0 %v76
    %v500 = vpop.f32.mrb[0].mxu0
    %v501 = vadd.f32 0.0, %v500
    %v502 = vpop.f32.mrb[0].mxu0
    %v503 = vadd.f32 0.0, %v502
    %504 = vmatprep.mubr.f32.mxu0 0.0
    %505 = vmatmul.mubr.f32.gmra.mrb[0].mxu0 %v79
    %v506 = vpop.f32.mrb[0].mxu0
    %v507 = vadd.f32 0.0, %v506
    %v508 = vpop.f32.mrb[0].mxu0
    %v509 = vadd.f32 0.0, %v508
    %510 = vmatprep.mubr.f32.mxu0 0.0
    %511 = vmatmul.mubr.f32.gmra.mrb[0].mxu0 %v82
    %v512 = vpop.f32.mrb[0].mxu0
    %v513 = vadd.f32 0.0, %v512
    %v514 = vpop.f32.mrb[0].mxu0
    %v515 = vadd.f32 0.0, %v514
    %516 = vmatprep.mubr.f32.mxu0 0.0
    %517 = vmatmul.mubr.f32.gmra.mrb[0].mxu0 %v85
    %v518 = vpop.f32.mrb[0].mxu0
    %v519 = vadd.f32 0.0, %v518
    %v520 = vpop.f32.mrb[0].mxu0
    %v521 = vadd.f32 0.0, %v520
    %522 = vmatprep.mubr.f32.mxu0 0.0
    %523 = vmatmul.mubr.f32.gmra.mrb[0].mxu0 %v88
    %v524 = vpop.f32.mrb[0].mxu0
    %v525 = vadd.f32 0.0, %v524
    %v526 = vpop.f32.mrb[0].mxu0
    %v527 = vadd.f32 0.0, %v526
    %528 = vmatprep.mubr.f32.mxu0 0.0
    %529 = vmatmul.mubr.f32.gmra.mrb[0].mxu0 %v91
    %v530 = vpop.f32.mrb[0].mxu0
    %v531 = vadd.f32 0.0, %v530
    %v532 = vpop.f32.mrb[0].mxu0
    %v533 = vadd.f32 0.0, %v532
    %534 = vmatprep.mubr.f32.mxu0 0.0
    %535 = vmatmul.mubr.f32.gmra.mrb[0].mxu0 %v94
    %v536 = vpop.f32.mrb[0].mxu0
    %v537 = vadd.f32 0.0, %v536
    %v538 = vpop.f32.mrb[0].mxu0
    %v539 = vadd.f32 0.0, %v538
    %540 = vmatprep.mubr.f32.mxu0 0.0
    %541 = vmatmul.mubr.f32.gmra.mrb[0].mxu0 %v97
    %v542 = vpop.f32.mrb[0].mxu0
    %v543 = vadd.f32 0.0, %v542
    %v544 = vpop.f32.mrb[0].mxu0
    %v545 = vadd.f32 0.0, %v544
    %546 = vmatprep.mubr.f32.mxu0 0.0
    %547 = vmatmul.mubr.f32.gmra.mrb[0].mxu0 %v100
    %v548 = vpop.f32.mrb[0].mxu0
    %v549 = vadd.f32 0.0, %v548
    %v550 = vpop.f32.mrb[0].mxu0
    %v551 = vadd.f32 0.0, %v550
    %552 = vmatprep.mubr.f32.mxu0 0.0
    %553 = vmatmul.mubr.f32.gmra.mrb[0].mxu0 %v103
    %v554 = vpop.f32.mrb[0].mxu0
    %v555 = vadd.f32 0.0, %v554
    %v556 = vpop.f32.mrb[0].mxu0
    %v557 = vadd.f32 0.0, %v556
    %558 = vmatprep.mubr.f32.mxu0 0.0
    %559 = vmatmul.mubr.f32.gmra.mrb[0].mxu0 %v106
    %v560 = vpop.f32.mrb[0].mxu0
    %v561 = vadd.f32 0.0, %v560
    %v562 = vpop.f32.mrb[0].mxu0
    %v563 = vadd.f32 0.0, %v562
    %564 = vmatprep.mubr.f32.mxu0 0.0
    %565 = vmatmul.mubr.f32.gmra.mrb[0].mxu0 %v109
    %v566 = vpop.f32.mrb[0].mxu0
    %v567 = vadd.f32 0.0, %v566
    %v568 = vpop.f32.mrb[0].mxu0
    %v569 = vadd.f32 0.0, %v568
    %570 = vmatprep.mubr.f32.mxu0 0.0
    %571 = vmatmul.mubr.f32.gmra.mrb[0].mxu0 %v112
    %v572 = vpop.f32.mrb[0].mxu0
    %v573 = vadd.f32 0.0, %v572
    %v574 = vpop.f32.mrb[0].mxu0
    %v575 = vadd.f32 0.0, %v574
    %576 = vmatprep.mubr.f32.mxu0 0.0
    %577 = vmatmul.mubr.f32.gmra.mrb[0].mxu0 %v115
    %v578 = vpop.f32.mrb[0].mxu0
    %v579 = vadd.f32 0.0, %v578
    %v580 = vpop.f32.mrb[0].mxu0
    %v581 = vadd.f32 0.0, %v580
    %582 = vmatprep.mubr.f32.mxu0 0.0
    %583 = vmatmul.mubr.f32.gmra.mrb[0].mxu0 %v118
    %v584 = vpop.f32.mrb[0].mxu0
    %v585 = vadd.f32 0.0, %v584
    %v586 = vpop.f32.mrb[0].mxu0
    %v587 = vadd.f32 0.0, %v586
    %588 = vmatprep.mubr.f32.mxu0 0.0
    %589 = vmatmul.mubr.f32.gmra.mrb[0].mxu0 %v121
    %v590 = vpop.f32.mrb[0].mxu0
    %v591 = vadd.f32 0.0, %v590
    %v592 = vpop.f32.mrb[0].mxu0
    %v593 = vadd.f32 0.0, %v592
    %594 = vmatprep.mubr.f32.mxu0 0.0
    %595 = vmatmul.mubr.f32.gmra.mrb[0].mxu0 %v124
    %v596 = vpop.f32.mrb[0].mxu0
    %v597 = vadd.f32 0.0, %v596
    %v598 = vpop.f32.mrb[0].mxu0
    %v599 = vadd.f32 0.0, %v598
    %600 = vmatprep.mubr.f32.mxu0 0.0
    %601 = vmatmul.mubr.f32.gmra.mrb[0].mxu0 %v127
    %v602 = vpop.f32.mrb[0].mxu0
    %v603 = vadd.f32 0.0, %v602
    %v604 = vpop.f32.mrb[0].mxu0
    %v605 = vadd.f32 0.0, %v604
    %606 = vmatprep.mubr.f32.mxu0 0.0
    %607 = vmatmul.mubr.f32.gmra.mrb[0].mxu0 %v130
    %v608 = vpop.f32.mrb[0].mxu0
    %v609 = vadd.f32 0.0, %v608
    %v610 = vpop.f32.mrb[0].mxu0
    %v611 = vadd.f32 0.0, %v610
    %612 = vmatprep.mubr.f32.mxu0 0.0
    %613 = vmatmul.mubr.f32.gmra.mrb[0].mxu0 %v133
    %v614 = vpop.f32.mrb[0].mxu0
    %v615 = vadd.f32 0.0, %v614
    %v616 = vpop.f32.mrb[0].mxu0
    %v617 = vadd.f32 0.0, %v616
    %618 = vmatprep.mubr.f32.mxu0 0.0
    %619 = vmatmul.mubr.f32.gmra.mrb[0].mxu0 %v136
    %v620 = vpop.f32.mrb[0].mxu0
    %v621 = vadd.f32 0.0, %v620
    %v622 = vpop.f32.mrb[0].mxu0
    %v623 = vadd.f32 0.0, %v622
    %624 = vmatprep.mubr.f32.mxu0 0.0
    %625 = vmatmul.mubr.f32.gmra.mrb[0].mxu0 %v139
    %v626 = vpop.f32.mrb[0].mxu0
    %v627 = vadd.f32 0.0, %v626
    %v628 = vpop.f32.mrb[0].mxu0
    %v629 = vadd.f32 0.0, %v628
    %630 = vmatprep.mubr.f32.mxu0 0.0
    %631 = vmatmul.mubr.f32.gmra.mrb[0].mxu0 %v142
    %v632 = vpop.f32.mrb[0].mxu0
    %v633 = vadd.f32 0.0, %v632
    %v634 = vpop.f32.mrb[0].mxu0
    %v635 = vadd.f32 0.0, %v634
    %636 = vmatprep.mubr.f32.mxu0 0.0
    %637 = vmatmul.mubr.f32.gmra.mrb[0].mxu0 %v145
    %v638 = vpop.f32.mrb[0].mxu0
    %v639 = vadd.f32 0.0, %v638
    %v640 = vpop.f32.mrb[0].mxu0
    %v641 = vadd.f32 0.0, %v640
    %642 = vmatprep.mubr.f32.mxu0 0.0
    %643 = vmatmul.mubr.f32.gmra.mrb[0].mxu0 %v148
    %v644 = vpop.f32.mrb[0].mxu0
    %v645 = vadd.f32 0.0, %v644
    %v646 = vpop.f32.mrb[0].mxu0
    %v647 = vadd.f32 0.0, %v646
    %648 = vmatprep.mubr.f32.mxu0 0.0
    %649 = vmatmul.mubr.f32.gmra.mrb[0].mxu0 %v151
    %v650 = vpop.f32.mrb[0].mxu0
    %v651 = vadd.f32 0.0, %v650
    %v652 = vpop.f32.mrb[0].mxu0
    %v653 = vadd.f32 0.0, %v652
    %654 = vmatprep.mubr.f32.mxu0 0.0
    %655 = vmatmul.mubr.f32.gmra.mrb[0].mxu0 %v154
    %v656 = vpop.f32.mrb[0].mxu0
    %v657 = vadd.f32 0.0, %v656
    %v658 = vpop.f32.mrb[0].mxu0
    %v659 = vadd.f32 0.0, %v658
    %660 = vmatprep.mubr.f32.mxu0 0.0
    %661 = vmatmul.mubr.f32.gmra.mrb[0].mxu0 %v157
    %v662 = vpop.f32.mrb[0].mxu0
    %v663 = vadd.f32 0.0, %v662
    %v664 = vpop.f32.mrb[0].mxu0
    %v665 = vadd.f32 0.0, %v664
    %666 = vmatprep.mubr.f32.mxu0 0.0
    %667 = vmatmul.mubr.f32.gmra.mrb[0].mxu0 %v160
    %v668 = vpop.f32.mrb[0].mxu0
    %v669 = vadd.f32 0.0, %v668
    %v670 = vpop.f32.mrb[0].mxu0
    %v671 = vadd.f32 0.0, %v670
    %672 = vmatprep.mubr.f32.mxu0 0.0
    %673 = vmatmul.mubr.f32.gmra.mrb[0].mxu0 %v163
    %v674 = vpop.f32.mrb[0].mxu0
    %v675 = vadd.f32 0.0, %v674
    %v676 = vpop.f32.mrb[0].mxu0
    %v677 = vadd.f32 0.0, %v676
    %678 = vdwg.mxu0
    %v679 = vld [vmem:[%s1] sm:$0xf]
    %v680 = vld [vmem:[%s1 + $0x4] sm:$0xf]
    %v683 = vlaneseq
    %v684 = vshrl.u32 %v683, 7
    %v685 = vsub.s32 0, %v684
    %v686 = vrot.slane %v679, %v685
    %v687 = vlaneseq
    %v688 = vshrl.u32 %v687, 7
    %v689 = vsub.s32 1, %v688
    %v690 = vrot.slane %v679, %v689
    %v691 = vlaneseq
    %v692 = vshrl.u32 %v691, 7
    %v693 = vsub.s32 2, %v692
    %v694 = vrot.slane %v679, %v693
    %v695 = vlaneseq
    %v696 = vshrl.u32 %v695, 7
    %v697 = vsub.s32 3, %v696
    %v698 = vrot.slane %v679, %v697
    %v699 = vlaneseq
    %v700 = vshrl.u32 %v699, 7
    %v701 = vsub.s32 0, %v700
    %v702 = vrot.slane %v680, %v701
    %v703 = vlaneseq
    %v704 = vshrl.u32 %v703, 7
    %v705 = vsub.s32 1, %v704
    %v706 = vrot.slane %v680, %v705
    %v707 = vlaneseq
    %v708 = vshrl.u32 %v707, 7
    %v709 = vsub.s32 2, %v708
    %v710 = vrot.slane %v680, %v709
    %v711 = vlaneseq
    %v712 = vshrl.u32 %v711, 7
    %v713 = vsub.s32 3, %v712
    %v714 = vrot.slane %v680, %v713
    %v723 = vadd.f32 %v232, %v686
    %v724 = vadd.f32 %v234, %v690
    %v725 = vadd.f32 %v489, %v694
    %v726 = vadd.f32 %v491, %v698
    %v727 = vadd.f32 %v238, %v686
    %v728 = vadd.f32 %v240, %v690
    %v729 = vadd.f32 %v495, %v694
    %v730 = vadd.f32 %v497, %v698
    %v731 = vadd.f32 %v244, %v686
    %v732 = vadd.f32 %v246, %v690
    %v733 = vadd.f32 %v501, %v694
    %v734 = vadd.f32 %v503, %v698
    %v735 = vadd.f32 %v250, %v686
    %v736 = vadd.f32 %v252, %v690
    %v737 = vadd.f32 %v507, %v694
    %v738 = vadd.f32 %v509, %v698
    %v739 = vadd.f32 %v256, %v686
    %v740 = vadd.f32 %v258, %v690
    %v741 = vadd.f32 %v513, %v694
    %v742 = vadd.f32 %v515, %v698
    %v743 = vadd.f32 %v262, %v686
    %v744 = vadd.f32 %v264, %v690
    %v745 = vadd.f32 %v519, %v694
    %v746 = vadd.f32 %v521, %v698
    %v747 = vadd.f32 %v268, %v686
    %v748 = vadd.f32 %v270, %v690
    %v749 = vadd.f32 %v525, %v694
    %v750 = vadd.f32 %v527, %v698
    %v751 = vadd.f32 %v274, %v686
    %v752 = vadd.f32 %v276, %v690
    %v753 = vadd.f32 %v531, %v694
    %v754 = vadd.f32 %v533, %v698
    %v755 = vadd.f32 %v280, %v686
    %v756 = vadd.f32 %v282, %v690
    %v757 = vadd.f32 %v537, %v694
    %v758 = vadd.f32 %v539, %v698
    %v759 = vadd.f32 %v286, %v686
    %v760 = vadd.f32 %v288, %v690
    %v761 = vadd.f32 %v543, %v694
    %v762 = vadd.f32 %v545, %v698
    %v763 = vadd.f32 %v292, %v686
    %v764 = vadd.f32 %v294, %v690
    %v765 = vadd.f32 %v549, %v694
    %v766 = vadd.f32 %v551, %v698
    %v767 = vadd.f32 %v298, %v686
    %v768 = vadd.f32 %v300, %v690
    %v769 = vadd.f32 %v555, %v694
    %v770 = vadd.f32 %v557, %v698
    %v771 = vadd.f32 %v304, %v686
    %v772 = vadd.f32 %v306, %v690
    %v773 = vadd.f32 %v561, %v694
    %v774 = vadd.f32 %v563, %v698
    %v775 = vadd.f32 %v310, %v686
    %v776 = vadd.f32 %v312, %v690
    %v777 = vadd.f32 %v567, %v694
    %v778 = vadd.f32 %v569, %v698
    %v779 = vadd.f32 %v316, %v686
    %v780 = vadd.f32 %v318, %v690
    %v781 = vadd.f32 %v573, %v694
    %v782 = vadd.f32 %v575, %v698
    %v783 = vadd.f32 %v322, %v686
    %v784 = vadd.f32 %v324, %v690
    %v785 = vadd.f32 %v579, %v694
    %v786 = vadd.f32 %v581, %v698
    %v787 = vadd.f32 %v328, %v702
    %v788 = vadd.f32 %v330, %v706
    %v789 = vadd.f32 %v585, %v710
    %v790 = vadd.f32 %v587, %v714
    %v791 = vadd.f32 %v334, %v702
    %v792 = vadd.f32 %v336, %v706
    %v793 = vadd.f32 %v591, %v710
    %v794 = vadd.f32 %v593, %v714
    %v795 = vadd.f32 %v340, %v702
    %v796 = vadd.f32 %v342, %v706
    %v797 = vadd.f32 %v597, %v710
    %v798 = vadd.f32 %v599, %v714
    %v799 = vadd.f32 %v346, %v702
    %v800 = vadd.f32 %v348, %v706
    %v801 = vadd.f32 %v603, %v710
    %v802 = vadd.f32 %v605, %v714
    %v803 = vadd.f32 %v352, %v702
    %v804 = vadd.f32 %v354, %v706
    %v805 = vadd.f32 %v609, %v710
    %v806 = vadd.f32 %v611, %v714
    %v807 = vadd.f32 %v358, %v702
    %v808 = vadd.f32 %v360, %v706
    %v809 = vadd.f32 %v615, %v710
    %v810 = vadd.f32 %v617, %v714
    %v811 = vadd.f32 %v364, %v702
    %v812 = vadd.f32 %v366, %v706
    %v813 = vadd.f32 %v621, %v710
    %v814 = vadd.f32 %v623, %v714
    %v815 = vadd.f32 %v370, %v702
    %v816 = vadd.f32 %v372, %v706
    %v817 = vadd.f32 %v627, %v710
    %v818 = vadd.f32 %v629, %v714
    %v819 = vadd.f32 %v376, %v702
    %v820 = vadd.f32 %v378, %v706
    %v821 = vadd.f32 %v633, %v710
    %v822 = vadd.f32 %v635, %v714
    %v823 = vadd.f32 %v382, %v702
    %v824 = vadd.f32 %v384, %v706
    %v825 = vadd.f32 %v639, %v710
    %v826 = vadd.f32 %v641, %v714
    %v827 = vadd.f32 %v388, %v702
    %v828 = vadd.f32 %v390, %v706
    %v829 = vadd.f32 %v645, %v710
    %v830 = vadd.f32 %v647, %v714
    %v831 = vadd.f32 %v394, %v702
    %v832 = vadd.f32 %v396, %v706
    %v833 = vadd.f32 %v651, %v710
    %v834 = vadd.f32 %v653, %v714
    %v835 = vadd.f32 %v400, %v702
    %v836 = vadd.f32 %v402, %v706
    %v837 = vadd.f32 %v657, %v710
    %v838 = vadd.f32 %v659, %v714
    %v839 = vadd.f32 %v406, %v702
    %v840 = vadd.f32 %v408, %v706
    %v841 = vadd.f32 %v663, %v710
    %v842 = vadd.f32 %v665, %v714
    %v843 = vadd.f32 %v412, %v702
    %v844 = vadd.f32 %v414, %v706
    %v845 = vadd.f32 %v669, %v710
    %v846 = vadd.f32 %v671, %v714
    %v847 = vadd.f32 %v418, %v702
    %v848 = vadd.f32 %v420, %v706
    %v849 = vadd.f32 %v675, %v710
    %v850 = vadd.f32 %v677, %v714
    %v851 = vmax.f32 %v723, 0.0
    %v852 = vmax.f32 %v724, 0.0
    %v853 = vmax.f32 %v725, 0.0
    %v854 = vmax.f32 %v726, 0.0
    %v855 = vmax.f32 %v727, 0.0
    %v856 = vmax.f32 %v728, 0.0
    %v857 = vmax.f32 %v729, 0.0
    %v858 = vmax.f32 %v730, 0.0
    %v859 = vmax.f32 %v731, 0.0
    %v860 = vmax.f32 %v732, 0.0
    %v861 = vmax.f32 %v733, 0.0
    %v862 = vmax.f32 %v734, 0.0
    %v863 = vmax.f32 %v735, 0.0
    %v864 = vmax.f32 %v736, 0.0
    %v865 = vmax.f32 %v737, 0.0
    %v866 = vmax.f32 %v738, 0.0
    %v867 = vmax.f32 %v739, 0.0
    %v868 = vmax.f32 %v740, 0.0
    %v869 = vmax.f32 %v741, 0.0
    %v870 = vmax.f32 %v742, 0.0
    %v871 = vmax.f32 %v743, 0.0
    %v872 = vmax.f32 %v744, 0.0
    %v873 = vmax.f32 %v745, 0.0
    %v874 = vmax.f32 %v746, 0.0
    %v875 = vmax.f32 %v747, 0.0
    %v876 = vmax.f32 %v748, 0.0
    %v877 = vmax.f32 %v749, 0.0
    %v878 = vmax.f32 %v750, 0.0
    %v879 = vmax.f32 %v751, 0.0
    %v880 = vmax.f32 %v752, 0.0
    %v881 = vmax.f32 %v753, 0.0
    %v882 = vmax.f32 %v754, 0.0
    %v883 = vmax.f32 %v755, 0.0
    %v884 = vmax.f32 %v756, 0.0
    %v885 = vmax.f32 %v757, 0.0
    %v886 = vmax.f32 %v758, 0.0
    %v887 = vmax.f32 %v759, 0.0
    %v888 = vmax.f32 %v760, 0.0
    %v889 = vmax.f32 %v761, 0.0
    %v890 = vmax.f32 %v762, 0.0
    %v891 = vmax.f32 %v763, 0.0
    %v892 = vmax.f32 %v764, 0.0
    %v893 = vmax.f32 %v765, 0.0
    %v894 = vmax.f32 %v766, 0.0
    %v895 = vmax.f32 %v767, 0.0
    %v896 = vmax.f32 %v768, 0.0
    %v897 = vmax.f32 %v769, 0.0
    %v898 = vmax.f32 %v770, 0.0
    %v899 = vmax.f32 %v771, 0.0
    %v900 = vmax.f32 %v772, 0.0
    %v901 = vmax.f32 %v773, 0.0
    %v902 = vmax.f32 %v774, 0.0
    %v903 = vmax.f32 %v775, 0.0
    %v904 = vmax.f32 %v776, 0.0
    %v905 = vmax.f32 %v777, 0.0
    %v906 = vmax.f32 %v778, 0.0
    %v907 = vmax.f32 %v779, 0.0
    %v908 = vmax.f32 %v780, 0.0
    %v909 = vmax.f32 %v781, 0.0
    %v910 = vmax.f32 %v782, 0.0
    %v911 = vmax.f32 %v783, 0.0
    %v912 = vmax.f32 %v784, 0.0
    %v913 = vmax.f32 %v785, 0.0
    %v914 = vmax.f32 %v786, 0.0
    %v915 = vmax.f32 %v787, 0.0
    %v916 = vmax.f32 %v788, 0.0
    %v917 = vmax.f32 %v789, 0.0
    %v918 = vmax.f32 %v790, 0.0
    %v919 = vmax.f32 %v791, 0.0
    %v920 = vmax.f32 %v792, 0.0
    %v921 = vmax.f32 %v793, 0.0
    %v922 = vmax.f32 %v794, 0.0
    %v923 = vmax.f32 %v795, 0.0
    %v924 = vmax.f32 %v796, 0.0
    %v925 = vmax.f32 %v797, 0.0
    %v926 = vmax.f32 %v798, 0.0
    %v927 = vmax.f32 %v799, 0.0
    %v928 = vmax.f32 %v800, 0.0
    %v929 = vmax.f32 %v801, 0.0
    %v930 = vmax.f32 %v802, 0.0
    %v931 = vmax.f32 %v803, 0.0
    %v932 = vmax.f32 %v804, 0.0
    %v933 = vmax.f32 %v805, 0.0
    %v934 = vmax.f32 %v806, 0.0
    %v935 = vmax.f32 %v807, 0.0
    %v936 = vmax.f32 %v808, 0.0
    %v937 = vmax.f32 %v809, 0.0
    %v938 = vmax.f32 %v810, 0.0
    %v939 = vmax.f32 %v811, 0.0
    %v940 = vmax.f32 %v812, 0.0
    %v941 = vmax.f32 %v813, 0.0
    %v942 = vmax.f32 %v814, 0.0
    %v943 = vmax.f32 %v815, 0.0
    %v944 = vmax.f32 %v816, 0.0
    %v945 = vmax.f32 %v817, 0.0
    %v946 = vmax.f32 %v818, 0.0
    %v947 = vmax.f32 %v819, 0.0
    %v948 = vmax.f32 %v820, 0.0
    %v949 = vmax.f32 %v821, 0.0
    %v950 = vmax.f32 %v822, 0.0
    %v951 = vmax.f32 %v823, 0.0
    %v952 = vmax.f32 %v824, 0.0
    %v953 = vmax.f32 %v825, 0.0
    %v954 = vmax.f32 %v826, 0.0
    %v955 = vmax.f32 %v827, 0.0
    %v956 = vmax.f32 %v828, 0.0
    %v957 = vmax.f32 %v829, 0.0
    %v958 = vmax.f32 %v830, 0.0
    %v959 = vmax.f32 %v831, 0.0
    %v960 = vmax.f32 %v832, 0.0
    %v961 = vmax.f32 %v833, 0.0
    %v962 = vmax.f32 %v834, 0.0
    %v963 = vmax.f32 %v835, 0.0
    %v964 = vmax.f32 %v836, 0.0
    %v965 = vmax.f32 %v837, 0.0
    %v966 = vmax.f32 %v838, 0.0
    %v967 = vmax.f32 %v839, 0.0
    %v968 = vmax.f32 %v840, 0.0
    %v969 = vmax.f32 %v841, 0.0
    %v970 = vmax.f32 %v842, 0.0
    %v971 = vmax.f32 %v843, 0.0
    %v972 = vmax.f32 %v844, 0.0
    %v973 = vmax.f32 %v845, 0.0
    %v974 = vmax.f32 %v846, 0.0
    %v975 = vmax.f32 %v847, 0.0
    %v976 = vmax.f32 %v848, 0.0
    %v977 = vmax.f32 %v849, 0.0
    %v978 = vmax.f32 %v850, 0.0
    %v979 = vld [vmem:[%s3] sm:$0xff]
    %v980 = vld [vmem:[%s3 + $0x8] sm:$0xff]
    %v981 = vld [vmem:[%s3 + $0x10] sm:$0xff]
    %v982 = vld [vmem:[%s3 + $0x18] sm:$0xff]
    %v983 = vld [vmem:[%s3 + $0x20] sm:$0xff]
    %v984 = vld [vmem:[%s3 + $0x28] sm:$0xff]
    %v985 = vld [vmem:[%s3 + $0x30] sm:$0xff]
    %v986 = vld [vmem:[%s3 + $0x38] sm:$0xff]
    %v987 = vld [vmem:[%s3 + $0x40] sm:$0xff]
    %v988 = vld [vmem:[%s3 + $0x48] sm:$0xff]
    %v989 = vld [vmem:[%s3 + $0x50] sm:$0xff]
    %v990 = vld [vmem:[%s3 + $0x58] sm:$0xff]
    %v991 = vld [vmem:[%s3 + $0x60] sm:$0xff]
    %v992 = vld [vmem:[%s3 + $0x68] sm:$0xff]
    %v993 = vld [vmem:[%s3 + $0x70] sm:$0xff]
    %v994 = vld [vmem:[%s3 + $0x78] sm:$0xff]
    %v995 = vld [vmem:[%s3 + $0x80] sm:$0xff]
    %v996 = vld [vmem:[%s3 + $0x88] sm:$0xff]
    %v997 = vld [vmem:[%s3 + $0x90] sm:$0xff]
    %v998 = vld [vmem:[%s3 + $0x98] sm:$0xff]
    %v999 = vld [vmem:[%s3 + $0xa0] sm:$0xff]
    %v1000 = vld [vmem:[%s3 + $0xa8] sm:$0xff]
    %v1001 = vld [vmem:[%s3 + $0xb0] sm:$0xff]
    %v1002 = vld [vmem:[%s3 + $0xb8] sm:$0xff]
    %v1003 = vld [vmem:[%s3 + $0xc0] sm:$0xff]
    %v1004 = vld [vmem:[%s3 + $0xc8] sm:$0xff]
    %v1005 = vld [vmem:[%s3 + $0xd0] sm:$0xff]
    %v1006 = vld [vmem:[%s3 + $0xd8] sm:$0xff]
    %v1007 = vld [vmem:[%s3 + $0xe0] sm:$0xff]
    %v1008 = vld [vmem:[%s3 + $0xe8] sm:$0xff]
    %v1009 = vld [vmem:[%s3 + $0xf0] sm:$0xff]
    %v1010 = vld [vmem:[%s3 + $0xf8] sm:$0xff]
    %v1011 = vld [vmem:[%s3 + $0x100] sm:$0xff]
    %v1012 = vld [vmem:[%s3 + $0x108] sm:$0xff]
    %v1013 = vld [vmem:[%s3 + $0x110] sm:$0xff]
    %v1014 = vld [vmem:[%s3 + $0x118] sm:$0xff]
    %v1015 = vld [vmem:[%s3 + $0x120] sm:$0xff]
    %v1016 = vld [vmem:[%s3 + $0x128] sm:$0xff]
    %v1017 = vld [vmem:[%s3 + $0x130] sm:$0xff]
    %v1018 = vld [vmem:[%s3 + $0x138] sm:$0xff]
    %v1019 = vld [vmem:[%s3 + $0x140] sm:$0xff]
    %v1020 = vld [vmem:[%s3 + $0x148] sm:$0xff]
    %v1021 = vld [vmem:[%s3 + $0x150] sm:$0xff]
    %v1022 = vld [vmem:[%s3 + $0x158] sm:$0xff]
    %v1023 = vld [vmem:[%s3 + $0x160] sm:$0xff]
    %v1024 = vld [vmem:[%s3 + $0x168] sm:$0xff]
    %v1025 = vld [vmem:[%s3 + $0x170] sm:$0xff]
    %v1026 = vld [vmem:[%s3 + $0x178] sm:$0xff]
    %v1027 = vld [vmem:[%s3 + $0x180] sm:$0xff]
    %v1028 = vld [vmem:[%s3 + $0x188] sm:$0xff]
    %v1029 = vld [vmem:[%s3 + $0x190] sm:$0xff]
    %v1030 = vld [vmem:[%s3 + $0x198] sm:$0xff]
    %v1031 = vld [vmem:[%s3 + $0x1a0] sm:$0xff]
    %v1032 = vld [vmem:[%s3 + $0x1a8] sm:$0xff]
    %v1033 = vld [vmem:[%s3 + $0x1b0] sm:$0xff]
    %v1034 = vld [vmem:[%s3 + $0x1b8] sm:$0xff]
    %v1035 = vld [vmem:[%s3 + $0x1c0] sm:$0xff]
    %v1036 = vld [vmem:[%s3 + $0x1c8] sm:$0xff]
    %v1037 = vld [vmem:[%s3 + $0x1d0] sm:$0xff]
    %v1038 = vld [vmem:[%s3 + $0x1d8] sm:$0xff]
    %v1039 = vld [vmem:[%s3 + $0x1e0] sm:$0xff]
    %v1040 = vld [vmem:[%s3 + $0x1e8] sm:$0xff]
    %v1041 = vld [vmem:[%s3 + $0x1f0] sm:$0xff]
    %v1042 = vld [vmem:[%s3 + $0x1f8] sm:$0xff]
    %1043 = vmatprep.subr.mxu0 0.0
    %1044 = vmatpush1.msra.mxu0 %v979
    %1045 = vmatprep.subr.mxu0 0.0
    %1046 = vmatpush1.msra.mxu0 %v980
    %1047 = vmatprep.subr.mxu0 0.0
    %1048 = vmatpush1.msra.mxu0 %v981
    %1049 = vmatprep.subr.mxu0 0.0
    %1050 = vmatpush1.msra.mxu0 %v982
    %1051 = vmatprep.subr.mxu0 0.0
    %1052 = vmatpush1.msra.mxu0 %v983
    %1053 = vmatprep.subr.mxu0 0.0
    %1054 = vmatpush1.msra.mxu0 %v984
    %1055 = vmatprep.subr.mxu0 0.0
    %1056 = vmatpush1.msra.mxu0 %v985
    %1057 = vmatprep.subr.mxu0 0.0
    %1058 = vmatpush1.msra.mxu0 %v986
    %1059 = vmatprep.subr.mxu0 0.0
    %1060 = vmatpush1.msra.mxu0 %v987
    %1061 = vmatprep.subr.mxu0 0.0
    %1062 = vmatpush1.msra.mxu0 %v988
    %1063 = vmatprep.subr.mxu0 0.0
    %1064 = vmatpush1.msra.mxu0 %v989
    %1065 = vmatprep.subr.mxu0 0.0
    %1066 = vmatpush1.msra.mxu0 %v990
    %1067 = vmatprep.subr.mxu0 0.0
    %1068 = vmatpush1.msra.mxu0 %v991
    %1069 = vmatprep.subr.mxu0 0.0
    %1070 = vmatpush1.msra.mxu0 %v992
    %1071 = vmatprep.subr.mxu0 0.0
    %1072 = vmatpush1.msra.mxu0 %v993
    %1073 = vmatprep.subr.mxu0 0.0
    %1074 = vmatpush1.msra.mxu0 %v994
    %1075 = vmatprep.subr.mxu0 0.0
    %1076 = vmatpush1.msra.mxu0 %v995
    %1077 = vmatprep.subr.mxu0 0.0
    %1078 = vmatpush1.msra.mxu0 %v996
    %1079 = vmatprep.subr.mxu0 0.0
    %1080 = vmatpush1.msra.mxu0 %v997
    %1081 = vmatprep.subr.mxu0 0.0
    %1082 = vmatpush1.msra.mxu0 %v998
    %1083 = vmatprep.subr.mxu0 0.0
    %1084 = vmatpush1.msra.mxu0 %v999
    %1085 = vmatprep.subr.mxu0 0.0
    %1086 = vmatpush1.msra.mxu0 %v1000
    %1087 = vmatprep.subr.mxu0 0.0
    %1088 = vmatpush1.msra.mxu0 %v1001
    %1089 = vmatprep.subr.mxu0 0.0
    %1090 = vmatpush1.msra.mxu0 %v1002
    %1091 = vmatprep.subr.mxu0 0.0
    %1092 = vmatpush1.msra.mxu0 %v1003
    %1093 = vmatprep.subr.mxu0 0.0
    %1094 = vmatpush1.msra.mxu0 %v1004
    %1095 = vmatprep.subr.mxu0 0.0
    %1096 = vmatpush1.msra.mxu0 %v1005
    %1097 = vmatprep.subr.mxu0 0.0
    %1098 = vmatpush1.msra.mxu0 %v1006
    %1099 = vmatprep.subr.mxu0 0.0
    %1100 = vmatpush1.msra.mxu0 %v1007
    %1101 = vmatprep.subr.mxu0 0.0
    %1102 = vmatpush1.msra.mxu0 %v1008
    %1103 = vmatprep.subr.mxu0 0.0
    %1104 = vmatpush1.msra.mxu0 %v1009
    %1105 = vmatprep.subr.mxu0 0.0
    %1106 = vmatpush1.msra.mxu0 %v1010
    %1107 = vmatprep.mubr.f32.mxu0 %v852
    %1108 = vmatmul.mubr.f32.gmra.mrb[0].mxu0 %v851
    %v1109 = vpop.f32.mrb[0].mxu0
    %v1110 = vadd.f32 0.0, %v1109
    %v1111 = vpop.f32.mrb[0].mxu0
    %1112 = vmatprep.mubr.f32.mxu0 %v856
    %1113 = vmatmul.mubr.f32.gmra.mrb[0].mxu0 %v855
    %v1114 = vpop.f32.mrb[0].mxu0
    %v1115 = vadd.f32 0.0, %v1114
    %v1116 = vpop.f32.mrb[0].mxu0
    %1117 = vmatprep.mubr.f32.mxu0 %v860
    %1118 = vmatmul.mubr.f32.gmra.mrb[0].mxu0 %v859
    %v1119 = vpop.f32.mrb[0].mxu0
    %v1120 = vadd.f32 0.0, %v1119
    %v1121 = vpop.f32.mrb[0].mxu0
    %1122 = vmatprep.mubr.f32.mxu0 %v864
    %1123 = vmatmul.mubr.f32.gmra.mrb[0].mxu0 %v863
    %v1124 = vpop.f32.mrb[0].mxu0
    %v1125 = vadd.f32 0.0, %v1124
    %v1126 = vpop.f32.mrb[0].mxu0
    %1127 = vmatprep.mubr.f32.mxu0 %v868
    %1128 = vmatmul.mubr.f32.gmra.mrb[0].mxu0 %v867
    %v1129 = vpop.f32.mrb[0].mxu0
    %v1130 = vadd.f32 0.0, %v1129
    %v1131 = vpop.f32.mrb[0].mxu0
    %1132 = vmatprep.mubr.f32.mxu0 %v872
    %1133 = vmatmul.mubr.f32.gmra.mrb[0].mxu0 %v871
    %v1134 = vpop.f32.mrb[0].mxu0
    %v1135 = vadd.f32 0.0, %v1134
    %v1136 = vpop.f32.mrb[0].mxu0
    %1137 = vmatprep.mubr.f32.mxu0 %v876
    %1138 = vmatmul.mubr.f32.gmra.mrb[0].mxu0 %v875
    %v1139 = vpop.f32.mrb[0].mxu0
    %v1140 = vadd.f32 0.0, %v1139
    %v1141 = vpop.f32.mrb[0].mxu0
    %1142 = vmatprep.mubr.f32.mxu0 %v880
    %1143 = vmatmul.mubr.f32.gmra.mrb[0].mxu0 %v879
    %v1144 = vpop.f32.mrb[0].mxu0
    %v1145 = vadd.f32 0.0, %v1144
    %v1146 = vpop.f32.mrb[0].mxu0
    %1147 = vmatprep.mubr.f32.mxu0 %v884
    %1148 = vmatmul.mubr.f32.gmra.mrb[0].mxu0 %v883
    %v1149 = vpop.f32.mrb[0].mxu0
    %v1150 = vadd.f32 0.0, %v1149
    %v1151 = vpop.f32.mrb[0].mxu0
    %1152 = vmatprep.mubr.f32.mxu0 %v888
    %1153 = vmatmul.mubr.f32.gmra.mrb[0].mxu0 %v887
    %v1154 = vpop.f32.mrb[0].mxu0
    %v1155 = vadd.f32 0.0, %v1154
    %v1156 = vpop.f32.mrb[0].mxu0
    %1157 = vmatprep.mubr.f32.mxu0 %v892
    %1158 = vmatmul.mubr.f32.gmra.mrb[0].mxu0 %v891
    %v1159 = vpop.f32.mrb[0].mxu0
    %v1160 = vadd.f32 0.0, %v1159
    %v1161 = vpop.f32.mrb[0].mxu0
    %1162 = vmatprep.mubr.f32.mxu0 %v896
    %1163 = vmatmul.mubr.f32.gmra.mrb[0].mxu0 %v895
    %v1164 = vpop.f32.mrb[0].mxu0
    %v1165 = vadd.f32 0.0, %v1164
    %v1166 = vpop.f32.mrb[0].mxu0
    %1167 = vmatprep.mubr.f32.mxu0 %v900
    %1168 = vmatmul.mubr.f32.gmra.mrb[0].mxu0 %v899
    %v1169 = vpop.f32.mrb[0].mxu0
    %v1170 = vadd.f32 0.0, %v1169
    %v1171 = vpop.f32.mrb[0].mxu0
    %1172 = vmatprep.mubr.f32.mxu0 %v904
    %1173 = vmatmul.mubr.f32.gmra.mrb[0].mxu0 %v903
    %v1174 = vpop.f32.mrb[0].mxu0
    %v1175 = vadd.f32 0.0, %v1174
    %v1176 = vpop.f32.mrb[0].mxu0
    %1177 = vmatprep.mubr.f32.mxu0 %v908
    %1178 = vmatmul.mubr.f32.gmra.mrb[0].mxu0 %v907
    %v1179 = vpop.f32.mrb[0].mxu0
    %v1180 = vadd.f32 0.0, %v1179
    %v1181 = vpop.f32.mrb[0].mxu0
    %1182 = vmatprep.mubr.f32.mxu0 %v912
    %1183 = vmatmul.mubr.f32.gmra.mrb[0].mxu0 %v911
    %v1184 = vpop.f32.mrb[0].mxu0
    %v1185 = vadd.f32 0.0, %v1184
    %v1186 = vpop.f32.mrb[0].mxu0
    %1187 = vmatprep.mubr.f32.mxu0 %v916
    %1188 = vmatmul.mubr.f32.gmra.mrb[0].mxu0 %v915
    %v1189 = vpop.f32.mrb[0].mxu0
    %v1190 = vadd.f32 0.0, %v1189
    %v1191 = vpop.f32.mrb[0].mxu0
    %1192 = vmatprep.mubr.f32.mxu0 %v920
    %1193 = vmatmul.mubr.f32.gmra.mrb[0].mxu0 %v919
    %v1194 = vpop.f32.mrb[0].mxu0
    %v1195 = vadd.f32 0.0, %v1194
    %v1196 = vpop.f32.mrb[0].mxu0
    %1197 = vmatprep.mubr.f32.mxu0 %v924
    %1198 = vmatmul.mubr.f32.gmra.mrb[0].mxu0 %v923
    %v1199 = vpop.f32.mrb[0].mxu0
    %v1200 = vadd.f32 0.0, %v1199
    %v1201 = vpop.f32.mrb[0].mxu0
    %1202 = vmatprep.mubr.f32.mxu0 %v928
    %1203 = vmatmul.mubr.f32.gmra.mrb[0].mxu0 %v927
    %v1204 = vpop.f32.mrb[0].mxu0
    %v1205 = vadd.f32 0.0, %v1204
    %v1206 = vpop.f32.mrb[0].mxu0
    %1207 = vmatprep.mubr.f32.mxu0 %v932
    %1208 = vmatmul.mubr.f32.gmra.mrb[0].mxu0 %v931
    %v1209 = vpop.f32.mrb[0].mxu0
    %v1210 = vadd.f32 0.0, %v1209
    %v1211 = vpop.f32.mrb[0].mxu0
    %1212 = vmatprep.mubr.f32.mxu0 %v936
    %1213 = vmatmul.mubr.f32.gmra.mrb[0].mxu0 %v935
    %v1214 = vpop.f32.mrb[0].mxu0
    %v1215 = vadd.f32 0.0, %v1214
    %v1216 = vpop.f32.mrb[0].mxu0
    %1217 = vmatprep.mubr.f32.mxu0 %v940
    %1218 = vmatmul.mubr.f32.gmra.mrb[0].mxu0 %v939
    %v1219 = vpop.f32.mrb[0].mxu0
    %v1220 = vadd.f32 0.0, %v1219
    %v1221 = vpop.f32.mrb[0].mxu0
    %1222 = vmatprep.mubr.f32.mxu0 %v944
    %1223 = vmatmul.mubr.f32.gmra.mrb[0].mxu0 %v943
    %v1224 = vpop.f32.mrb[0].mxu0
    %v1225 = vadd.f32 0.0, %v1224
    %v1226 = vpop.f32.mrb[0].mxu0
    %1227 = vmatprep.mubr.f32.mxu0 %v948
    %1228 = vmatmul.mubr.f32.gmra.mrb[0].mxu0 %v947
    %v1229 = vpop.f32.mrb[0].mxu0
    %v1230 = vadd.f32 0.0, %v1229
    %v1231 = vpop.f32.mrb[0].mxu0
    %1232 = vmatprep.mubr.f32.mxu0 %v952
    %1233 = vmatmul.mubr.f32.gmra.mrb[0].mxu0 %v951
    %v1234 = vpop.f32.mrb[0].mxu0
    %v1235 = vadd.f32 0.0, %v1234
    %v1236 = vpop.f32.mrb[0].mxu0
    %1237 = vmatprep.mubr.f32.mxu0 %v956
    %1238 = vmatmul.mubr.f32.gmra.mrb[0].mxu0 %v955
    %v1239 = vpop.f32.mrb[0].mxu0
    %v1240 = vadd.f32 0.0, %v1239
    %v1241 = vpop.f32.mrb[0].mxu0
    %1242 = vmatprep.mubr.f32.mxu0 %v960
    %1243 = vmatmul.mubr.f32.gmra.mrb[0].mxu0 %v959
    %v1244 = vpop.f32.mrb[0].mxu0
    %v1245 = vadd.f32 0.0, %v1244
    %v1246 = vpop.f32.mrb[0].mxu0
    %1247 = vmatprep.mubr.f32.mxu0 %v964
    %1248 = vmatmul.mubr.f32.gmra.mrb[0].mxu0 %v963
    %v1249 = vpop.f32.mrb[0].mxu0
    %v1250 = vadd.f32 0.0, %v1249
    %v1251 = vpop.f32.mrb[0].mxu0
    %1252 = vmatprep.mubr.f32.mxu0 %v968
    %1253 = vmatmul.mubr.f32.gmra.mrb[0].mxu0 %v967
    %v1254 = vpop.f32.mrb[0].mxu0
    %v1255 = vadd.f32 0.0, %v1254
    %v1256 = vpop.f32.mrb[0].mxu0
    %1257 = vmatprep.mubr.f32.mxu0 %v972
    %1258 = vmatmul.mubr.f32.gmra.mrb[0].mxu0 %v971
    %v1259 = vpop.f32.mrb[0].mxu0
    %v1260 = vadd.f32 0.0, %v1259
    %v1261 = vpop.f32.mrb[0].mxu0
    %1262 = vmatprep.mubr.f32.mxu0 %v976
    %1263 = vmatmul.mubr.f32.gmra.mrb[0].mxu0 %v975
    %v1264 = vpop.f32.mrb[0].mxu0
    %v1265 = vadd.f32 0.0, %v1264
    %v1266 = vpop.f32.mrb[0].mxu0
    %1267 = vdwg.mxu0
    %1268 = vmatprep.subr.mxu0 0.0
    %1269 = vmatpush1.msra.mxu0 %v1011
    %1270 = vmatprep.subr.mxu0 0.0
    %1271 = vmatpush1.msra.mxu0 %v1012
    %1272 = vmatprep.subr.mxu0 0.0
    %1273 = vmatpush1.msra.mxu0 %v1013
    %1274 = vmatprep.subr.mxu0 0.0
    %1275 = vmatpush1.msra.mxu0 %v1014
    %1276 = vmatprep.subr.mxu0 0.0
    %1277 = vmatpush1.msra.mxu0 %v1015
    %1278 = vmatprep.subr.mxu0 0.0
    %1279 = vmatpush1.msra.mxu0 %v1016
    %1280 = vmatprep.subr.mxu0 0.0
    %1281 = vmatpush1.msra.mxu0 %v1017
    %1282 = vmatprep.subr.mxu0 0.0
    %1283 = vmatpush1.msra.mxu0 %v1018
    %1284 = vmatprep.subr.mxu0 0.0
    %1285 = vmatpush1.msra.mxu0 %v1019
    %1286 = vmatprep.subr.mxu0 0.0
    %1287 = vmatpush1.msra.mxu0 %v1020
    %1288 = vmatprep.subr.mxu0 0.0
    %1289 = vmatpush1.msra.mxu0 %v1021
    %1290 = vmatprep.subr.mxu0 0.0
    %1291 = vmatpush1.msra.mxu0 %v1022
    %1292 = vmatprep.subr.mxu0 0.0
    %1293 = vmatpush1.msra.mxu0 %v1023
    %1294 = vmatprep.subr.mxu0 0.0
    %1295 = vmatpush1.msra.mxu0 %v1024
    %1296 = vmatprep.subr.mxu0 0.0
    %1297 = vmatpush1.msra.mxu0 %v1025
    %1298 = vmatprep.subr.mxu0 0.0
    %1299 = vmatpush1.msra.mxu0 %v1026
    %1300 = vmatprep.subr.mxu0 0.0
    %1301 = vmatpush1.msra.mxu0 %v1027
    %1302 = vmatprep.subr.mxu0 0.0
    %1303 = vmatpush1.msra.mxu0 %v1028
    %1304 = vmatprep.subr.mxu0 0.0
    %1305 = vmatpush1.msra.mxu0 %v1029
    %1306 = vmatprep.subr.mxu0 0.0
    %1307 = vmatpush1.msra.mxu0 %v1030
    %1308 = vmatprep.subr.mxu0 0.0
    %1309 = vmatpush1.msra.mxu0 %v1031
    %1310 = vmatprep.subr.mxu0 0.0
    %1311 = vmatpush1.msra.mxu0 %v1032
    %1312 = vmatprep.subr.mxu0 0.0
    %1313 = vmatpush1.msra.mxu0 %v1033
    %1314 = vmatprep.subr.mxu0 0.0
    %1315 = vmatpush1.msra.mxu0 %v1034
    %1316 = vmatprep.subr.mxu0 0.0
    %1317 = vmatpush1.msra.mxu0 %v1035
    %1318 = vmatprep.subr.mxu0 0.0
    %1319 = vmatpush1.msra.mxu0 %v1036
    %1320 = vmatprep.subr.mxu0 0.0
    %1321 = vmatpush1.msra.mxu0 %v1037
    %1322 = vmatprep.subr.mxu0 0.0
    %1323 = vmatpush1.msra.mxu0 %v1038
    %1324 = vmatprep.subr.mxu0 0.0
    %1325 = vmatpush1.msra.mxu0 %v1039
    %1326 = vmatprep.subr.mxu0 0.0
    %1327 = vmatpush1.msra.mxu0 %v1040
    %1328 = vmatprep.subr.mxu0 0.0
    %1329 = vmatpush1.msra.mxu0 %v1041
    %1330 = vmatprep.subr.mxu0 0.0
    %1331 = vmatpush1.msra.mxu0 %v1042
    %1332 = vmatprep.mubr.f32.mxu0 %v854
    %1333 = vmatmul.mubr.f32.gmra.mrb[0].mxu0 %v853
    %v1334 = vpop.f32.mrb[0].mxu0
    %v1335 = vadd.f32 %v1110, %v1334
    %v1336 = vpop.f32.mrb[0].mxu0
    %1337 = vmatprep.mubr.f32.mxu0 %v858
    %1338 = vmatmul.mubr.f32.gmra.mrb[0].mxu0 %v857
    %v1339 = vpop.f32.mrb[0].mxu0
    %v1340 = vadd.f32 %v1115, %v1339
    %v1341 = vpop.f32.mrb[0].mxu0
    %1342 = vmatprep.mubr.f32.mxu0 %v862
    %1343 = vmatmul.mubr.f32.gmra.mrb[0].mxu0 %v861
    %v1344 = vpop.f32.mrb[0].mxu0
    %v1345 = vadd.f32 %v1120, %v1344
    %v1346 = vpop.f32.mrb[0].mxu0
    %1347 = vmatprep.mubr.f32.mxu0 %v866
    %1348 = vmatmul.mubr.f32.gmra.mrb[0].mxu0 %v865
    %v1349 = vpop.f32.mrb[0].mxu0
    %v1350 = vadd.f32 %v1125, %v1349
    %v1351 = vpop.f32.mrb[0].mxu0
    %1352 = vmatprep.mubr.f32.mxu0 %v870
    %1353 = vmatmul.mubr.f32.gmra.mrb[0].mxu0 %v869
    %v1354 = vpop.f32.mrb[0].mxu0
    %v1355 = vadd.f32 %v1130, %v1354
    %v1356 = vpop.f32.mrb[0].mxu0
    %1357 = vmatprep.mubr.f32.mxu0 %v874
    %1358 = vmatmul.mubr.f32.gmra.mrb[0].mxu0 %v873
    %v1359 = vpop.f32.mrb[0].mxu0
    %v1360 = vadd.f32 %v1135, %v1359
    %v1361 = vpop.f32.mrb[0].mxu0
    %1362 = vmatprep.mubr.f32.mxu0 %v878
    %1363 = vmatmul.mubr.f32.gmra.mrb[0].mxu0 %v877
    %v1364 = vpop.f32.mrb[0].mxu0
    %v1365 = vadd.f32 %v1140, %v1364
    %v1366 = vpop.f32.mrb[0].mxu0
    %1367 = vmatprep.mubr.f32.mxu0 %v882
    %1368 = vmatmul.mubr.f32.gmra.mrb[0].mxu0 %v881
    %v1369 = vpop.f32.mrb[0].mxu0
    %v1370 = vadd.f32 %v1145, %v1369
    %v1371 = vpop.f32.mrb[0].mxu0
    %1372 = vmatprep.mubr.f32.mxu0 %v886
    %1373 = vmatmul.mubr.f32.gmra.mrb[0].mxu0 %v885
    %v1374 = vpop.f32.mrb[0].mxu0
    %v1375 = vadd.f32 %v1150, %v1374
    %v1376 = vpop.f32.mrb[0].mxu0
    %1377 = vmatprep.mubr.f32.mxu0 %v890
    %1378 = vmatmul.mubr.f32.gmra.mrb[0].mxu0 %v889
    %v1379 = vpop.f32.mrb[0].mxu0
    %v1380 = vadd.f32 %v1155, %v1379
    %v1381 = vpop.f32.mrb[0].mxu0
    %1382 = vmatprep.mubr.f32.mxu0 %v894
    %1383 = vmatmul.mubr.f32.gmra.mrb[0].mxu0 %v893
    %v1384 = vpop.f32.mrb[0].mxu0
    %v1385 = vadd.f32 %v1160, %v1384
    %v1386 = vpop.f32.mrb[0].mxu0
    %1387 = vmatprep.mubr.f32.mxu0 %v898
    %1388 = vmatmul.mubr.f32.gmra.mrb[0].mxu0 %v897
    %v1389 = vpop.f32.mrb[0].mxu0
    %v1390 = vadd.f32 %v1165, %v1389
    %v1391 = vpop.f32.mrb[0].mxu0
    %1392 = vmatprep.mubr.f32.mxu0 %v902
    %1393 = vmatmul.mubr.f32.gmra.mrb[0].mxu0 %v901
    %v1394 = vpop.f32.mrb[0].mxu0
    %v1395 = vadd.f32 %v1170, %v1394
    %v1396 = vpop.f32.mrb[0].mxu0
    %1397 = vmatprep.mubr.f32.mxu0 %v906
    %1398 = vmatmul.mubr.f32.gmra.mrb[0].mxu0 %v905
    %v1399 = vpop.f32.mrb[0].mxu0
    %v1400 = vadd.f32 %v1175, %v1399
    %v1401 = vpop.f32.mrb[0].mxu0
    %1402 = vmatprep.mubr.f32.mxu0 %v910
    %1403 = vmatmul.mubr.f32.gmra.mrb[0].mxu0 %v909
    %v1404 = vpop.f32.mrb[0].mxu0
    %v1405 = vadd.f32 %v1180, %v1404
    %v1406 = vpop.f32.mrb[0].mxu0
    %1407 = vmatprep.mubr.f32.mxu0 %v914
    %1408 = vmatmul.mubr.f32.gmra.mrb[0].mxu0 %v913
    %v1409 = vpop.f32.mrb[0].mxu0
    %v1410 = vadd.f32 %v1185, %v1409
    %v1411 = vpop.f32.mrb[0].mxu0
    %1412 = vmatprep.mubr.f32.mxu0 %v918
    %1413 = vmatmul.mubr.f32.gmra.mrb[0].mxu0 %v917
    %v1414 = vpop.f32.mrb[0].mxu0
    %v1415 = vadd.f32 %v1190, %v1414
    %v1416 = vpop.f32.mrb[0].mxu0
    %1417 = vmatprep.mubr.f32.mxu0 %v922
    %1418 = vmatmul.mubr.f32.gmra.mrb[0].mxu0 %v921
    %v1419 = vpop.f32.mrb[0].mxu0
    %v1420 = vadd.f32 %v1195, %v1419
    %v1421 = vpop.f32.mrb[0].mxu0
    %1422 = vmatprep.mubr.f32.mxu0 %v926
    %1423 = vmatmul.mubr.f32.gmra.mrb[0].mxu0 %v925
    %v1424 = vpop.f32.mrb[0].mxu0
    %v1425 = vadd.f32 %v1200, %v1424
    %v1426 = vpop.f32.mrb[0].mxu0
    %1427 = vmatprep.mubr.f32.mxu0 %v930
    %1428 = vmatmul.mubr.f32.gmra.mrb[0].mxu0 %v929
    %v1429 = vpop.f32.mrb[0].mxu0
    %v1430 = vadd.f32 %v1205, %v1429
    %v1431 = vpop.f32.mrb[0].mxu0
    %1432 = vmatprep.mubr.f32.mxu0 %v934
    %1433 = vmatmul.mubr.f32.gmra.mrb[0].mxu0 %v933
    %v1434 = vpop.f32.mrb[0].mxu0
    %v1435 = vadd.f32 %v1210, %v1434
    %v1436 = vpop.f32.mrb[0].mxu0
    %1437 = vmatprep.mubr.f32.mxu0 %v938
    %1438 = vmatmul.mubr.f32.gmra.mrb[0].mxu0 %v937
    %v1439 = vpop.f32.mrb[0].mxu0
    %v1440 = vadd.f32 %v1215, %v1439
    %v1441 = vpop.f32.mrb[0].mxu0
    %1442 = vmatprep.mubr.f32.mxu0 %v942
    %1443 = vmatmul.mubr.f32.gmra.mrb[0].mxu0 %v941
    %v1444 = vpop.f32.mrb[0].mxu0
    %v1445 = vadd.f32 %v1220, %v1444
    %v1446 = vpop.f32.mrb[0].mxu0
    %1447 = vmatprep.mubr.f32.mxu0 %v946
    %1448 = vmatmul.mubr.f32.gmra.mrb[0].mxu0 %v945
    %v1449 = vpop.f32.mrb[0].mxu0
    %v1450 = vadd.f32 %v1225, %v1449
    %v1451 = vpop.f32.mrb[0].mxu0
    %1452 = vmatprep.mubr.f32.mxu0 %v950
    %1453 = vmatmul.mubr.f32.gmra.mrb[0].mxu0 %v949
    %v1454 = vpop.f32.mrb[0].mxu0
    %v1455 = vadd.f32 %v1230, %v1454
    %v1456 = vpop.f32.mrb[0].mxu0
    %1457 = vmatprep.mubr.f32.mxu0 %v954
    %1458 = vmatmul.mubr.f32.gmra.mrb[0].mxu0 %v953
    %v1459 = vpop.f32.mrb[0].mxu0
    %v1460 = vadd.f32 %v1235, %v1459
    %v1461 = vpop.f32.mrb[0].mxu0
    %1462 = vmatprep.mubr.f32.mxu0 %v958
    %1463 = vmatmul.mubr.f32.gmra.mrb[0].mxu0 %v957
    %v1464 = vpop.f32.mrb[0].mxu0
    %v1465 = vadd.f32 %v1240, %v1464
    %v1466 = vpop.f32.mrb[0].mxu0
    %1467 = vmatprep.mubr.f32.mxu0 %v962
    %1468 = vmatmul.mubr.f32.gmra.mrb[0].mxu0 %v961
    %v1469 = vpop.f32.mrb[0].mxu0
    %v1470 = vadd.f32 %v1245, %v1469
    %v1471 = vpop.f32.mrb[0].mxu0
    %1472 = vmatprep.mubr.f32.mxu0 %v966
    %1473 = vmatmul.mubr.f32.gmra.mrb[0].mxu0 %v965
    %v1474 = vpop.f32.mrb[0].mxu0
    %v1475 = vadd.f32 %v1250, %v1474
    %v1476 = vpop.f32.mrb[0].mxu0
    %1477 = vmatprep.mubr.f32.mxu0 %v970
    %1478 = vmatmul.mubr.f32.gmra.mrb[0].mxu0 %v969
    %v1479 = vpop.f32.mrb[0].mxu0
    %v1480 = vadd.f32 %v1255, %v1479
    %v1481 = vpop.f32.mrb[0].mxu0
    %1482 = vmatprep.mubr.f32.mxu0 %v974
    %1483 = vmatmul.mubr.f32.gmra.mrb[0].mxu0 %v973
    %v1484 = vpop.f32.mrb[0].mxu0
    %v1485 = vadd.f32 %v1260, %v1484
    %v1486 = vpop.f32.mrb[0].mxu0
    %1487 = vmatprep.mubr.f32.mxu0 %v978
    %1488 = vmatmul.mubr.f32.gmra.mrb[0].mxu0 %v977
    %v1489 = vpop.f32.mrb[0].mxu0
    %v1490 = vadd.f32 %v1265, %v1489
    %v1491 = vpop.f32.mrb[0].mxu0
    %1492 = vdwg.mxu0
    %v1493 = vlaneseq
    %v1494 = vshrl.u32 %v1493, 7
    %v1495 = vadd.s32 %v1494, 8
    %v1496 = vadd.s32 %v1494, 16
    %v1497 = vadd.s32 %v1494, 24
    %v1498 = vadd.s32 %v1494, 32
    %v1499 = vadd.s32 %v1494, 40
    %v1500 = vadd.s32 %v1494, 48
    %v1501 = vadd.s32 %v1494, 56
    %v1502 = vadd.s32 %v1494, 64
    %v1503 = vadd.s32 %v1494, 72
    %v1504 = vadd.s32 %v1494, 80
    %v1505 = vadd.s32 %v1494, 88
    %v1506 = vadd.s32 %v1494, 96
    %v1507 = vadd.s32 %v1494, 104
    %v1508 = vadd.s32 %v1494, 112
    %v1509 = vadd.s32 %v1494, 120
    %vm1510 = vcmp.lt.s32.totalorder %v1494, 8
    %vm1511 = vcmp.lt.s32.totalorder %v1495, 8
    %vm1512 = vcmp.lt.s32.totalorder %v1496, 8
    %vm1513 = vcmp.lt.s32.totalorder %v1497, 8
    %vm1514 = vcmp.lt.s32.totalorder %v1498, 8
    %vm1515 = vcmp.lt.s32.totalorder %v1499, 8
    %vm1516 = vcmp.lt.s32.totalorder %v1500, 8
    %vm1517 = vcmp.lt.s32.totalorder %v1501, 8
    %vm1518 = vcmp.lt.s32.totalorder %v1502, 8
    %vm1519 = vcmp.lt.s32.totalorder %v1503, 8
    %vm1520 = vcmp.lt.s32.totalorder %v1504, 8
    %vm1521 = vcmp.lt.s32.totalorder %v1505, 8
    %vm1522 = vcmp.lt.s32.totalorder %v1506, 8
    %vm1523 = vcmp.lt.s32.totalorder %v1507, 8
    %vm1524 = vcmp.lt.s32.totalorder %v1508, 8
    %vm1525 = vcmp.lt.s32.totalorder %v1509, 8
    %v1526 = vsel %vm1510, %v1335, -1e+30
    %v1527 = vsel %vm1511, %v1340, -1e+30
    %v1528 = vsel %vm1512, %v1345, -1e+30
    %v1529 = vsel %vm1513, %v1350, -1e+30
    %v1530 = vsel %vm1514, %v1355, -1e+30
    %v1531 = vsel %vm1515, %v1360, -1e+30
    %v1532 = vsel %vm1516, %v1365, -1e+30
    %v1533 = vsel %vm1517, %v1370, -1e+30
    %v1534 = vsel %vm1518, %v1375, -1e+30
    %v1535 = vsel %vm1519, %v1380, -1e+30
    %v1536 = vsel %vm1520, %v1385, -1e+30
    %v1537 = vsel %vm1521, %v1390, -1e+30
    %v1538 = vsel %vm1522, %v1395, -1e+30
    %v1539 = vsel %vm1523, %v1400, -1e+30
    %v1540 = vsel %vm1524, %v1405, -1e+30
    %v1541 = vsel %vm1525, %v1410, -1e+30
    %v1542 = vsel %vm1510, %v1415, -1e+30
    %v1543 = vsel %vm1511, %v1420, -1e+30
    %v1544 = vsel %vm1512, %v1425, -1e+30
    %v1545 = vsel %vm1513, %v1430, -1e+30
    %v1546 = vsel %vm1514, %v1435, -1e+30
    %v1547 = vsel %vm1515, %v1440, -1e+30
    %v1548 = vsel %vm1516, %v1445, -1e+30
    %v1549 = vsel %vm1517, %v1450, -1e+30
    %v1550 = vsel %vm1518, %v1455, -1e+30
    %v1551 = vsel %vm1519, %v1460, -1e+30
    %v1552 = vsel %vm1520, %v1465, -1e+30
    %v1553 = vsel %vm1521, %v1470, -1e+30
    %v1554 = vsel %vm1522, %v1475, -1e+30
    %v1555 = vsel %vm1523, %v1480, -1e+30
    %v1556 = vsel %vm1524, %v1485, -1e+30
    %v1557 = vsel %vm1525, %v1490, -1e+30
    %vm1558 = vcmask 7168
    %v1559 = vsel %vm1558, %v1526, -inf
    %v1560 = vsel %vm1558, %v1527, -inf
    %v1561 = vsel %vm1558, %v1528, -inf
    %v1562 = vmax.f32 %v1559, %v1561
    %v1563 = vsel %vm1558, %v1529, -inf
    %v1564 = vmax.f32 %v1560, %v1563
    %v1565 = vsel %vm1558, %v1530, -inf
    %v1566 = vmax.f32 %v1562, %v1565
    %v1567 = vsel %vm1558, %v1531, -inf
    %v1568 = vmax.f32 %v1564, %v1567
    %v1569 = vsel %vm1558, %v1532, -inf
    %v1570 = vmax.f32 %v1566, %v1569
    %v1571 = vsel %vm1558, %v1533, -inf
    %v1572 = vmax.f32 %v1568, %v1571
    %v1573 = vsel %vm1558, %v1534, -inf
    %v1574 = vmax.f32 %v1570, %v1573
    %v1575 = vsel %vm1558, %v1535, -inf
    %v1576 = vmax.f32 %v1572, %v1575
    %v1577 = vsel %vm1558, %v1536, -inf
    %v1578 = vmax.f32 %v1574, %v1577
    %v1579 = vsel %vm1558, %v1537, -inf
    %v1580 = vmax.f32 %v1576, %v1579
    %v1581 = vsel %vm1558, %v1538, -inf
    %v1582 = vmax.f32 %v1578, %v1581
    %v1583 = vsel %vm1558, %v1539, -inf
    %v1584 = vmax.f32 %v1580, %v1583
    %v1585 = vsel %vm1558, %v1540, -inf
    %v1586 = vmax.f32 %v1582, %v1585
    %v1587 = vsel %vm1558, %v1541, -inf
    %v1588 = vmax.f32 %v1584, %v1587
    %v1589 = vmax.f32 %v1586, %v1588
    %v1590 = vrot.slane %v1589, 4
    %v1591 = vmax.f32 %v1589, %v1590
    %v1592 = vrot.slane %v1591, 2
    %v1593 = vmax.f32 %v1591, %v1592
    %v1594 = vrot.slane %v1593, 1
    %v1595 = vmax.f32 %v1593, %v1594
    %v1596 = vsel %vm1558, %v1542, -inf
    %v1597 = vsel %vm1558, %v1543, -inf
    %v1598 = vsel %vm1558, %v1544, -inf
    %v1599 = vmax.f32 %v1596, %v1598
    %v1600 = vsel %vm1558, %v1545, -inf
    %v1601 = vmax.f32 %v1597, %v1600
    %v1602 = vsel %vm1558, %v1546, -inf
    %v1603 = vmax.f32 %v1599, %v1602
    %v1604 = vsel %vm1558, %v1547, -inf
    %v1605 = vmax.f32 %v1601, %v1604
    %v1606 = vsel %vm1558, %v1548, -inf
    %v1607 = vmax.f32 %v1603, %v1606
    %v1608 = vsel %vm1558, %v1549, -inf
    %v1609 = vmax.f32 %v1605, %v1608
    %v1610 = vsel %vm1558, %v1550, -inf
    %v1611 = vmax.f32 %v1607, %v1610
    %v1612 = vsel %vm1558, %v1551, -inf
    %v1613 = vmax.f32 %v1609, %v1612
    %v1614 = vsel %vm1558, %v1552, -inf
    %v1615 = vmax.f32 %v1611, %v1614
    %v1616 = vsel %vm1558, %v1553, -inf
    %v1617 = vmax.f32 %v1613, %v1616
    %v1618 = vsel %vm1558, %v1554, -inf
    %v1619 = vmax.f32 %v1615, %v1618
    %v1620 = vsel %vm1558, %v1555, -inf
    %v1621 = vmax.f32 %v1617, %v1620
    %v1622 = vsel %vm1558, %v1556, -inf
    %v1623 = vmax.f32 %v1619, %v1622
    %v1624 = vsel %vm1558, %v1557, -inf
    %v1625 = vmax.f32 %v1621, %v1624
    %v1626 = vmax.f32 %v1623, %v1625
    %v1627 = vrot.slane %v1626, 4
    %v1628 = vmax.f32 %v1626, %v1627
    %v1629 = vrot.slane %v1628, 2
    %v1630 = vmax.f32 %v1628, %v1629
    %v1631 = vrot.slane %v1630, 1
    %v1632 = vmax.f32 %v1630, %v1631
    %v1633 = vsub.f32 %v1526, %v1595
    %v1634 = vsub.f32 %v1527, %v1595
    %v1635 = vsub.f32 %v1528, %v1595
    %v1636 = vsub.f32 %v1529, %v1595
    %v1637 = vsub.f32 %v1530, %v1595
    %v1638 = vsub.f32 %v1531, %v1595
    %v1639 = vsub.f32 %v1532, %v1595
    %v1640 = vsub.f32 %v1533, %v1595
    %v1641 = vsub.f32 %v1534, %v1595
    %v1642 = vsub.f32 %v1535, %v1595
    %v1643 = vsub.f32 %v1536, %v1595
    %v1644 = vsub.f32 %v1537, %v1595
    %v1645 = vsub.f32 %v1538, %v1595
    %v1646 = vsub.f32 %v1539, %v1595
    %v1647 = vsub.f32 %v1540, %v1595
    %v1648 = vsub.f32 %v1541, %v1595
    %v1649 = vsub.f32 %v1542, %v1632
    %v1650 = vsub.f32 %v1543, %v1632
    %v1651 = vsub.f32 %v1544, %v1632
    %v1652 = vsub.f32 %v1545, %v1632
    %v1653 = vsub.f32 %v1546, %v1632
    %v1654 = vsub.f32 %v1547, %v1632
    %v1655 = vsub.f32 %v1548, %v1632
    %v1656 = vsub.f32 %v1549, %v1632
    %v1657 = vsub.f32 %v1550, %v1632
    %v1658 = vsub.f32 %v1551, %v1632
    %v1659 = vsub.f32 %v1552, %v1632
    %v1660 = vsub.f32 %v1553, %v1632
    %v1661 = vsub.f32 %v1554, %v1632
    %v1662 = vsub.f32 %v1555, %v1632
    %v1663 = vsub.f32 %v1556, %v1632
    %v1664 = vsub.f32 %v1557, %v1632
    %v1665 = vmul.f32 %v1633, 1.442695
    %v1666 = vpow.pop %v1665
    %v1667 = vmul.f32 %v1634, 1.442695
    %v1668 = vpow.pop %v1667
    %v1669 = vmul.f32 %v1635, 1.442695
    %v1670 = vpow.pop %v1669
    %v1671 = vmul.f32 %v1636, 1.442695
    %v1672 = vpow.pop %v1671
    %v1673 = vmul.f32 %v1637, 1.442695
    %v1674 = vpow.pop %v1673
    %v1675 = vmul.f32 %v1638, 1.442695
    %v1676 = vpow.pop %v1675
    %v1677 = vmul.f32 %v1639, 1.442695
    %v1678 = vpow.pop %v1677
    %v1679 = vmul.f32 %v1640, 1.442695
    %v1680 = vpow.pop %v1679
    %v1681 = vmul.f32 %v1641, 1.442695
    %v1682 = vpow.pop %v1681
    %v1683 = vmul.f32 %v1642, 1.442695
    %v1684 = vpow.pop %v1683
    %v1685 = vmul.f32 %v1643, 1.442695
    %v1686 = vpow.pop %v1685
    %v1687 = vmul.f32 %v1644, 1.442695
    %v1688 = vpow.pop %v1687
    %v1689 = vmul.f32 %v1645, 1.442695
    %v1690 = vpow.pop %v1689
    %v1691 = vmul.f32 %v1646, 1.442695
    %v1692 = vpow.pop %v1691
    %v1693 = vmul.f32 %v1647, 1.442695
    %v1694 = vpow.pop %v1693
    %v1695 = vmul.f32 %v1648, 1.442695
    %v1696 = vpow.pop %v1695
    %v1697 = vmul.f32 %v1649, 1.442695
    %v1698 = vpow.pop %v1697
    %v1699 = vmul.f32 %v1650, 1.442695
    %v1700 = vpow.pop %v1699
    %v1701 = vmul.f32 %v1651, 1.442695
    %v1702 = vpow.pop %v1701
    %v1703 = vmul.f32 %v1652, 1.442695
    %v1704 = vpow.pop %v1703
    %v1705 = vmul.f32 %v1653, 1.442695
    %v1706 = vpow.pop %v1705
    %v1707 = vmul.f32 %v1654, 1.442695
    %v1708 = vpow.pop %v1707
    %v1709 = vmul.f32 %v1655, 1.442695
    %v1710 = vpow.pop %v1709
    %v1711 = vmul.f32 %v1656, 1.442695
    %v1712 = vpow.pop %v1711
    %v1713 = vmul.f32 %v1657, 1.442695
    %v1714 = vpow.pop %v1713
    %v1715 = vmul.f32 %v1658, 1.442695
    %v1716 = vpow.pop %v1715
    %v1717 = vmul.f32 %v1659, 1.442695
    %v1718 = vpow.pop %v1717
    %v1719 = vmul.f32 %v1660, 1.442695
    %v1720 = vpow.pop %v1719
    %v1721 = vmul.f32 %v1661, 1.442695
    %v1722 = vpow.pop %v1721
    %v1723 = vmul.f32 %v1662, 1.442695
    %v1724 = vpow.pop %v1723
    %v1725 = vmul.f32 %v1663, 1.442695
    %v1726 = vpow.pop %v1725
    %v1727 = vmul.f32 %v1664, 1.442695
    %v1728 = vpow.pop %v1727
    %v1729 = vsel %vm1558, %v1666, 0.0
    %v1730 = vsel %vm1558, %v1668, 0.0
    %v1731 = vadd.f32 %v1729, %v1730
    %v1732 = vsel %vm1558, %v1670, 0.0
    %v1733 = vadd.f32 %v1731, %v1732
    %v1734 = vsel %vm1558, %v1672, 0.0
    %v1735 = vadd.f32 %v1733, %v1734
    %v1736 = vsel %vm1558, %v1674, 0.0
    %v1737 = vadd.f32 %v1735, %v1736
    %v1738 = vsel %vm1558, %v1676, 0.0
    %v1739 = vadd.f32 %v1737, %v1738
    %v1740 = vsel %vm1558, %v1678, 0.0
    %v1741 = vadd.f32 %v1739, %v1740
    %v1742 = vsel %vm1558, %v1680, 0.0
    %v1743 = vadd.f32 %v1741, %v1742
    %v1744 = vsel %vm1558, %v1682, 0.0
    %v1745 = vadd.f32 %v1743, %v1744
    %v1746 = vsel %vm1558, %v1684, 0.0
    %v1747 = vadd.f32 %v1745, %v1746
    %v1748 = vsel %vm1558, %v1686, 0.0
    %v1749 = vadd.f32 %v1747, %v1748
    %v1750 = vsel %vm1558, %v1688, 0.0
    %v1751 = vadd.f32 %v1749, %v1750
    %v1752 = vsel %vm1558, %v1690, 0.0
    %v1753 = vadd.f32 %v1751, %v1752
    %v1754 = vsel %vm1558, %v1692, 0.0
    %v1755 = vadd.f32 %v1753, %v1754
    %v1756 = vsel %vm1558, %v1694, 0.0
    %v1757 = vadd.f32 %v1755, %v1756
    %v1758 = vsel %vm1558, %v1696, 0.0
    %v1759 = vadd.f32 %v1757, %v1758
    %v1760 = vrot.slane %v1759, 4
    %v1761 = vadd.f32 %v1759, %v1760
    %v1762 = vrot.slane %v1761, 2
    %v1763 = vadd.f32 %v1761, %v1762
    %v1764 = vrot.slane %v1763, 1
    %v1765 = vadd.f32 %v1763, %v1764
    %v1766 = vsel %vm1558, %v1698, 0.0
    %v1767 = vsel %vm1558, %v1700, 0.0
    %v1768 = vadd.f32 %v1766, %v1767
    %v1769 = vsel %vm1558, %v1702, 0.0
    %v1770 = vadd.f32 %v1768, %v1769
    %v1771 = vsel %vm1558, %v1704, 0.0
    %v1772 = vadd.f32 %v1770, %v1771
    %v1773 = vsel %vm1558, %v1706, 0.0
    %v1774 = vadd.f32 %v1772, %v1773
    %v1775 = vsel %vm1558, %v1708, 0.0
    %v1776 = vadd.f32 %v1774, %v1775
    %v1777 = vsel %vm1558, %v1710, 0.0
    %v1778 = vadd.f32 %v1776, %v1777
    %v1779 = vsel %vm1558, %v1712, 0.0
    %v1780 = vadd.f32 %v1778, %v1779
    %v1781 = vsel %vm1558, %v1714, 0.0
    %v1782 = vadd.f32 %v1780, %v1781
    %v1783 = vsel %vm1558, %v1716, 0.0
    %v1784 = vadd.f32 %v1782, %v1783
    %v1785 = vsel %vm1558, %v1718, 0.0
    %v1786 = vadd.f32 %v1784, %v1785
    %v1787 = vsel %vm1558, %v1720, 0.0
    %v1788 = vadd.f32 %v1786, %v1787
    %v1789 = vsel %vm1558, %v1722, 0.0
    %v1790 = vadd.f32 %v1788, %v1789
    %v1791 = vsel %vm1558, %v1724, 0.0
    %v1792 = vadd.f32 %v1790, %v1791
    %v1793 = vsel %vm1558, %v1726, 0.0
    %v1794 = vadd.f32 %v1792, %v1793
    %v1795 = vsel %vm1558, %v1728, 0.0
    %v1796 = vadd.f32 %v1794, %v1795
    %v1797 = vrot.slane %v1796, 4
    %v1798 = vadd.f32 %v1796, %v1797
    %v1799 = vrot.slane %v1798, 2
    %v1800 = vadd.f32 %v1798, %v1799
    %v1801 = vrot.slane %v1800, 1
    %v1802 = vadd.f32 %v1800, %v1801
    %v1803 = vrcp.pop %v1765
    %v1804 = vrcp.pop %v1802
    %v1805 = vmul.f32 %v1666, %v1803
    %v1806 = vmul.f32 %v1668, %v1803
    %v1807 = vmul.f32 %v1670, %v1803
    %v1808 = vmul.f32 %v1672, %v1803
    %v1809 = vmul.f32 %v1674, %v1803
    %v1810 = vmul.f32 %v1676, %v1803
    %v1811 = vmul.f32 %v1678, %v1803
    %v1812 = vmul.f32 %v1680, %v1803
    %v1813 = vmul.f32 %v1682, %v1803
    %v1814 = vmul.f32 %v1684, %v1803
    %v1815 = vmul.f32 %v1686, %v1803
    %v1816 = vmul.f32 %v1688, %v1803
    %v1817 = vmul.f32 %v1690, %v1803
    %v1818 = vmul.f32 %v1692, %v1803
    %v1819 = vmul.f32 %v1694, %v1803
    %v1820 = vmul.f32 %v1696, %v1803
    %v1821 = vmul.f32 %v1698, %v1804
    %v1822 = vmul.f32 %v1700, %v1804
    %v1823 = vmul.f32 %v1702, %v1804
    %v1824 = vmul.f32 %v1704, %v1804
    %v1825 = vmul.f32 %v1706, %v1804
    %v1826 = vmul.f32 %v1708, %v1804
    %v1827 = vmul.f32 %v1710, %v1804
    %v1828 = vmul.f32 %v1712, %v1804
    %v1829 = vmul.f32 %v1714, %v1804
    %v1830 = vmul.f32 %v1716, %v1804
    %v1831 = vmul.f32 %v1718, %v1804
    %v1832 = vmul.f32 %v1720, %v1804
    %v1833 = vmul.f32 %v1722, %v1804
    %v1834 = vmul.f32 %v1724, %v1804
    %v1835 = vmul.f32 %v1726, %v1804
    %v1836 = vmul.f32 %v1728, %v1804
    %1838 = vset.pattern.permute.xlu0 0
    %1839 = vperm.xlu0 %1838, %v1805
    %v1840 = vpop.permute.xlu0 %1839
    %1843 = vset.pattern.permute.xlu0 0
    %1844 = vperm.xlu0 %1843, %v1806
    %v1845 = vpop.permute.xlu0 %1844
    %1848 = vset.pattern.permute.xlu0 0
    %1849 = vperm.xlu0 %1848, %v1807
    %v1850 = vpop.permute.xlu0 %1849
    %1853 = vset.pattern.permute.xlu0 0
    %1854 = vperm.xlu0 %1853, %v1808
    %v1855 = vpop.permute.xlu0 %1854
    %1858 = vset.pattern.permute.xlu0 0
    %1859 = vperm.xlu0 %1858, %v1809
    %v1860 = vpop.permute.xlu0 %1859
    %1863 = vset.pattern.permute.xlu0 0
    %1864 = vperm.xlu0 %1863, %v1810
    %v1865 = vpop.permute.xlu0 %1864
    %1868 = vset.pattern.permute.xlu0 0
    %1869 = vperm.xlu0 %1868, %v1811
    %v1870 = vpop.permute.xlu0 %1869
    %1873 = vset.pattern.permute.xlu0 0
    %1874 = vperm.xlu0 %1873, %v1812
    %v1875 = vpop.permute.xlu0 %1874
    %1878 = vset.pattern.permute.xlu0 0
    %1879 = vperm.xlu0 %1878, %v1813
    %v1880 = vpop.permute.xlu0 %1879
    %1883 = vset.pattern.permute.xlu0 0
    %1884 = vperm.xlu0 %1883, %v1814
    %v1885 = vpop.permute.xlu0 %1884
    %1888 = vset.pattern.permute.xlu0 0
    %1889 = vperm.xlu0 %1888, %v1815
    %v1890 = vpop.permute.xlu0 %1889
    %1893 = vset.pattern.permute.xlu0 0
    %1894 = vperm.xlu0 %1893, %v1816
    %v1895 = vpop.permute.xlu0 %1894
    %1898 = vset.pattern.permute.xlu0 0
    %1899 = vperm.xlu0 %1898, %v1817
    %v1900 = vpop.permute.xlu0 %1899
    %1903 = vset.pattern.permute.xlu0 0
    %1904 = vperm.xlu0 %1903, %v1818
    %v1905 = vpop.permute.xlu0 %1904
    %1908 = vset.pattern.permute.xlu0 0
    %1909 = vperm.xlu0 %1908, %v1819
    %v1910 = vpop.permute.xlu0 %1909
    %1913 = vset.pattern.permute.xlu0 0
    %1914 = vperm.xlu0 %1913, %v1820
    %v1915 = vpop.permute.xlu0 %1914
    %1918 = vset.pattern.permute.xlu0 0
    %1919 = vperm.xlu0 %1918, %v1821
    %v1920 = vpop.permute.xlu0 %1919
    %1923 = vset.pattern.permute.xlu0 0
    %1924 = vperm.xlu0 %1923, %v1822
    %v1925 = vpop.permute.xlu0 %1924
    %1928 = vset.pattern.permute.xlu0 0
    %1929 = vperm.xlu0 %1928, %v1823
    %v1930 = vpop.permute.xlu0 %1929
    %1933 = vset.pattern.permute.xlu0 0
    %1934 = vperm.xlu0 %1933, %v1824
    %v1935 = vpop.permute.xlu0 %1934
    %1938 = vset.pattern.permute.xlu0 0
    %1939 = vperm.xlu0 %1938, %v1825
    %v1940 = vpop.permute.xlu0 %1939
    %1943 = vset.pattern.permute.xlu0 0
    %1944 = vperm.xlu0 %1943, %v1826
    %v1945 = vpop.permute.xlu0 %1944
    %1948 = vset.pattern.permute.xlu0 0
    %1949 = vperm.xlu0 %1948, %v1827
    %v1950 = vpop.permute.xlu0 %1949
    %1953 = vset.pattern.permute.xlu0 0
    %1954 = vperm.xlu0 %1953, %v1828
    %v1955 = vpop.permute.xlu0 %1954
    %1958 = vset.pattern.permute.xlu0 0
    %1959 = vperm.xlu0 %1958, %v1829
    %v1960 = vpop.permute.xlu0 %1959
    %1963 = vset.pattern.permute.xlu0 0
    %1964 = vperm.xlu0 %1963, %v1830
    %v1965 = vpop.permute.xlu0 %1964
    %1968 = vset.pattern.permute.xlu0 0
    %1969 = vperm.xlu0 %1968, %v1831
    %v1970 = vpop.permute.xlu0 %1969
    %1973 = vset.pattern.permute.xlu0 0
    %1974 = vperm.xlu0 %1973, %v1832
    %v1975 = vpop.permute.xlu0 %1974
    %1978 = vset.pattern.permute.xlu0 0
    %1979 = vperm.xlu0 %1978, %v1833
    %v1980 = vpop.permute.xlu0 %1979
    %1983 = vset.pattern.permute.xlu0 0
    %1984 = vperm.xlu0 %1983, %v1834
    %v1985 = vpop.permute.xlu0 %1984
    %1988 = vset.pattern.permute.xlu0 0
    %1989 = vperm.xlu0 %1988, %v1835
    %v1990 = vpop.permute.xlu0 %1989
    %1993 = vset.pattern.permute.xlu0 0
    %1994 = vperm.xlu0 %1993, %v1836
    %v1995 = vpop.permute.xlu0 %1994
    %v1997 = vmul.f32 %v20, %v1840
    %v1998 = vmul.f32 %v21, %v1845
    %v1999 = vmul.f32 %v22, %v1850
    %v2000 = vmul.f32 %v23, %v1855
    %v2001 = vmul.f32 %v24, %v1860
    %v2002 = vmul.f32 %v25, %v1865
    %v2003 = vmul.f32 %v26, %v1870
    %v2004 = vmul.f32 %v27, %v1875
    %v2005 = vmul.f32 %v28, %v1880
    %v2006 = vmul.f32 %v29, %v1885
    %v2007 = vmul.f32 %v30, %v1890
    %v2008 = vmul.f32 %v31, %v1895
    %v2009 = vmul.f32 %v32, %v1900
    %v2010 = vmul.f32 %v33, %v1905
    %v2011 = vmul.f32 %v34, %v1910
    %v2012 = vmul.f32 %v35, %v1915
    %v2013 = vmul.f32 %v36, %v1920
    %v2014 = vmul.f32 %v37, %v1925
    %v2015 = vmul.f32 %v38, %v1930
    %v2016 = vmul.f32 %v39, %v1935
    %v2017 = vmul.f32 %v40, %v1940
    %v2018 = vmul.f32 %v41, %v1945
    %v2019 = vmul.f32 %v42, %v1950
    %v2020 = vmul.f32 %v43, %v1955
    %v2021 = vmul.f32 %v44, %v1960
    %v2022 = vmul.f32 %v45, %v1965
    %v2023 = vmul.f32 %v46, %v1970
    %v2024 = vmul.f32 %v47, %v1975
    %v2025 = vmul.f32 %v48, %v1980
    %v2026 = vmul.f32 %v49, %v1985
    %v2027 = vmul.f32 %v50, %v1990
    %v2028 = vmul.f32 %v51, %v1995
    %v2029 = vsel %vm68, %v1997, 0.0
    %v2030 = vsel %vm68, %v1998, 0.0
    %v2031 = vadd.f32 %v2029, %v2030
    %v2032 = vsel %vm68, %v1999, 0.0
    %v2033 = vadd.f32 %v2031, %v2032
    %v2034 = vsel %vm68, %v2000, 0.0
    %v2035 = vadd.f32 %v2033, %v2034
    %v2036 = vsel %vm68, %v2001, 0.0
    %v2037 = vadd.f32 %v2035, %v2036
    %v2038 = vsel %vm68, %v2002, 0.0
    %v2039 = vadd.f32 %v2037, %v2038
    %v2040 = vsel %vm68, %v2003, 0.0
    %v2041 = vadd.f32 %v2039, %v2040
    %v2042 = vsel %vm68, %v2004, 0.0
    %v2043 = vadd.f32 %v2041, %v2042
    %v2044 = vsel %vm68, %v2005, 0.0
    %v2045 = vadd.f32 %v2043, %v2044
    %v2046 = vsel %vm68, %v2006, 0.0
    %v2047 = vadd.f32 %v2045, %v2046
    %v2048 = vsel %vm68, %v2007, 0.0
    %v2049 = vadd.f32 %v2047, %v2048
    %v2050 = vsel %vm68, %v2008, 0.0
    %v2051 = vadd.f32 %v2049, %v2050
    %v2052 = vsel %vm68, %v2009, 0.0
    %v2053 = vadd.f32 %v2051, %v2052
    %v2054 = vsel %vm68, %v2010, 0.0
    %v2055 = vadd.f32 %v2053, %v2054
    %v2056 = vsel %vm68, %v2011, 0.0
    %v2057 = vadd.f32 %v2055, %v2056
    %v2058 = vsel %vm68, %v2012, 0.0
    %v2059 = vadd.f32 %v2057, %v2058
    %v2060 = vrot.slane %v2059, 4
    %v2061 = vadd.f32 %v2059, %v2060
    %v2062 = vrot.slane %v2061, 2
    %v2063 = vadd.f32 %v2061, %v2062
    %v2064 = vrot.slane %v2063, 1
    %v2065 = vadd.f32 %v2063, %v2064
    %v2066 = vsel %vm68, %v2013, 0.0
    %v2067 = vsel %vm68, %v2014, 0.0
    %v2068 = vadd.f32 %v2066, %v2067
    %v2069 = vsel %vm68, %v2015, 0.0
    %v2070 = vadd.f32 %v2068, %v2069
    %v2071 = vsel %vm68, %v2016, 0.0
    %v2072 = vadd.f32 %v2070, %v2071
    %v2073 = vsel %vm68, %v2017, 0.0
    %v2074 = vadd.f32 %v2072, %v2073
    %v2075 = vsel %vm68, %v2018, 0.0
    %v2076 = vadd.f32 %v2074, %v2075
    %v2077 = vsel %vm68, %v2019, 0.0
    %v2078 = vadd.f32 %v2076, %v2077
    %v2079 = vsel %vm68, %v2020, 0.0
    %v2080 = vadd.f32 %v2078, %v2079
    %v2081 = vsel %vm68, %v2021, 0.0
    %v2082 = vadd.f32 %v2080, %v2081
    %v2083 = vsel %vm68, %v2022, 0.0
    %v2084 = vadd.f32 %v2082, %v2083
    %v2085 = vsel %vm68, %v2023, 0.0
    %v2086 = vadd.f32 %v2084, %v2085
    %v2087 = vsel %vm68, %v2024, 0.0
    %v2088 = vadd.f32 %v2086, %v2087
    %v2089 = vsel %vm68, %v2025, 0.0
    %v2090 = vadd.f32 %v2088, %v2089
    %v2091 = vsel %vm68, %v2026, 0.0
    %v2092 = vadd.f32 %v2090, %v2091
    %v2093 = vsel %vm68, %v2027, 0.0
    %v2094 = vadd.f32 %v2092, %v2093
    %v2095 = vsel %vm68, %v2028, 0.0
    %v2096 = vadd.f32 %v2094, %v2095
    %v2097 = vrot.slane %v2096, 4
    %v2098 = vadd.f32 %v2096, %v2097
    %v2099 = vrot.slane %v2098, 2
    %v2100 = vadd.f32 %v2098, %v2099
    %v2101 = vrot.slane %v2100, 1
    %v2102 = vadd.f32 %v2100, %v2101
    %vm2103 = vcmask 253952
    %2104 = vst.msk [vmem:[#allocation2] sm:$0x1] %vm2103, %v2065
    %2105 = vst.msk [vmem:[#allocation2 + $0x1] sm:$0x1] %vm2103, %v2102
    %2106 = vst.msk [vmem:[%s5] sm:$0xff] %vm1558, %v1805
    %2107 = vst.msk [vmem:[%s5 + $0x8] sm:$0xff] %vm1558, %v1806
    %2108 = vst.msk [vmem:[%s5 + $0x10] sm:$0xff] %vm1558, %v1807
    %2109 = vst.msk [vmem:[%s5 + $0x18] sm:$0xff] %vm1558, %v1808
    %2110 = vst.msk [vmem:[%s5 + $0x20] sm:$0xff] %vm1558, %v1809
    %2111 = vst.msk [vmem:[%s5 + $0x28] sm:$0xff] %vm1558, %v1810
    %2112 = vst.msk [vmem:[%s5 + $0x30] sm:$0xff] %vm1558, %v1811
    %2113 = vst.msk [vmem:[%s5 + $0x38] sm:$0xff] %vm1558, %v1812
    %2114 = vst.msk [vmem:[%s5 + $0x40] sm:$0xff] %vm1558, %v1813
    %2115 = vst.msk [vmem:[%s5 + $0x48] sm:$0xff] %vm1558, %v1814
    %2116 = vst.msk [vmem:[%s5 + $0x50] sm:$0xff] %vm1558, %v1815
    %2117 = vst.msk [vmem:[%s5 + $0x58] sm:$0xff] %vm1558, %v1816
    %2118 = vst.msk [vmem:[%s5 + $0x60] sm:$0xff] %vm1558, %v1817
    %2119 = vst.msk [vmem:[%s5 + $0x68] sm:$0xff] %vm1558, %v1818
    %2120 = vst.msk [vmem:[%s5 + $0x70] sm:$0xff] %vm1558, %v1819
    %2121 = vst.msk [vmem:[%s5 + $0x78] sm:$0xff] %vm1558, %v1820
    %2122 = vst.msk [vmem:[%s5 + $0x80] sm:$0xff] %vm1558, %v1821
    %2123 = vst.msk [vmem:[%s5 + $0x88] sm:$0xff] %vm1558, %v1822
    %2124 = vst.msk [vmem:[%s5 + $0x90] sm:$0xff] %vm1558, %v1823
    %2125 = vst.msk [vmem:[%s5 + $0x98] sm:$0xff] %vm1558, %v1824
    %2126 = vst.msk [vmem:[%s5 + $0xa0] sm:$0xff] %vm1558, %v1825
    %2127 = vst.msk [vmem:[%s5 + $0xa8] sm:$0xff] %vm1558, %v1826
    %2128 = vst.msk [vmem:[%s5 + $0xb0] sm:$0xff] %vm1558, %v1827
    %2129 = vst.msk [vmem:[%s5 + $0xb8] sm:$0xff] %vm1558, %v1828
    %2130 = vst.msk [vmem:[%s5 + $0xc0] sm:$0xff] %vm1558, %v1829
    %2131 = vst.msk [vmem:[%s5 + $0xc8] sm:$0xff] %vm1558, %v1830
    %2132 = vst.msk [vmem:[%s5 + $0xd0] sm:$0xff] %vm1558, %v1831
    %2133 = vst.msk [vmem:[%s5 + $0xd8] sm:$0xff] %vm1558, %v1832
    %2134 = vst.msk [vmem:[%s5 + $0xe0] sm:$0xff] %vm1558, %v1833
    %2135 = vst.msk [vmem:[%s5 + $0xe8] sm:$0xff] %vm1558, %v1834
    %2136 = vst.msk [vmem:[%s5 + $0xf0] sm:$0xff] %vm1558, %v1835
    %2137 = vst.msk [vmem:[%s5 + $0xf8] sm:$0xff] %vm1558, %v1836
    // Predicated region
    $region18: #{tpu_custom_call.1} parent=1 // pred_check
      _
    $region19: #{tpu_custom_call.1} parent=1 // pred_check_branch
      %2139 = sbr.rel (0) target = $region21
    $region20: #{tpu_custom_call.1} parent=1 // pred_region
      %s2141 = ssub.s32 32, 32
      %2142 = vsyncadd [#allocation3], %s2141
      %s2143 = sshll.u32 [#allocation2], 4
      %s2144 = int_to_ptr.vmem [resolvable:$true] %s2143
      %2149 = dma.vmem_to_hbm [thread:$0]  %s2144, 32, %s4, [#allocation3], 16, 16, 1
    $region21: #{tpu_custom_call.1} parent=1 // pred_fallthru
      _
    // Predicated region
    $region22: #{tpu_custom_call.1} parent=1 // pred_check
      _
    $region23: #{tpu_custom_call.1} parent=1 // pred_check_branch
      %2151 = sbr.rel (0) target = $region25
    $region24: #{tpu_custom_call.1} parent=1 // pred_region
      _
    $region25: #{tpu_custom_call.1} parent=1 // pred_fallthru
      _
    // Predicated region
    $region26: #{tpu_custom_call.1} parent=1 // pred_check
      _
    $region27: #{tpu_custom_call.1} parent=1 // pred_check_branch
      %2153 = sbr.rel (0) target = $region29
    $region28: #{tpu_custom_call.1} parent=1 // pred_region
      %2154 = dma.done [#allocation3], 32
    $region29: #{tpu_custom_call.1} parent=1 // pred_fallthru
      _
    // Predicated region
    $region30: #{tpu_custom_call.1} parent=1 // pred_check
      _
    $region31: #{tpu_custom_call.1} parent=1 // pred_check_branch
      %2156 = sbr.rel (0) target = $region33
    $region32: #{tpu_custom_call.1} parent=1 // pred_region
      _
    $region33: #{tpu_custom_call.1} parent=1 // pred_fallthru
      _
    %2157 = vsyncpa [#allocation3], 1

</llo_original>
